<compile_context>
chip_gen: v7x
topology: tpu7x:2x2x1
jax: 0.10.0
libtpu: 0.0.40
codegen_flags: <defaults>
</compile_context>

<pallas_src>
import functools

import jax
import jax.numpy as jnp
import numpy as np
from jax import lax
from jax.experimental import pallas as pl
from jax.experimental.pallas import tpu as pltpu


# ---------------- shared math helpers (identical in kernels and reference) ----------------
def _softplus(x):
    return jnp.maximum(x, 0.0) + jnp.log(1.0 + jnp.exp(-jnp.abs(x)))


def _sigmoid(x):
    return 1.0 / (1.0 + jnp.exp(-x))


def _silu(x):
    return x * _sigmoid(x)


# ---------------- generation-aware VMEM limit ----------------
@functools.lru_cache(maxsize=None)
def _vmem_limit_bytes():
    try:
        info = pltpu.get_tpu_info()
        cap = int(getattr(info, "vmem_capacity_bytes", 0))
        if cap > 0:
            return (cap * 3) // 4        # ~96 MiB on v5e/v6e, ~48 MiB on v7x
    except Exception:
        pass
    return 64 * 1024 * 1024


def _cp(sem):
    return pltpu.CompilerParams(dimension_semantics=sem,
                                vmem_limit_bytes=_vmem_limit_bytes())


# -------------------------------------- Pallas kernels --------------------------------------
def in_proj_kernel(x_full_ref, x_blk_ref, ln_blk_ref, w_ref, o_ref, scale_ref, *, eps):
    """Fused input RMSNorm + in_proj GEMM; weight streamed over d_model tiles (grid axis 1)."""
    j = pl.program_id(1)

    @pl.when(j == 0)
    def _():
        xf = x_full_ref[...].astype(jnp.float32)
        scale_ref[...] = lax.rsqrt(jnp.mean(xf * xf, axis=-1, keepdims=True) + eps)
        o_ref[...] = jnp.zeros_like(o_ref)

    xs = (x_blk_ref[...].astype(jnp.float32) * scale_ref[...]
          * ln_blk_ref[...].astype(jnp.float32))
    o_ref[...] += jnp.dot(xs.astype(w_ref.dtype), w_ref[...],
                          preferred_element_type=jnp.float32)


def ssm_kernel(proj_ref, conv_w_ref, conv_b_ref, d_ref, zb_ref, g_ref, state_ref, halo_ref,
               *, d_inner, n_qk, n_v, d_state, d_conv, headdim, chunk, mxu_dtype):
    """Weight-free DiscreteMamba2 chunk: causal depthwise conv (carried halo) + chunked SSM
    (carried state) + z-gate.  One (batch, chunk) grid point per invocation."""
    c = pl.program_id(1)
    T = chunk
    conv_dim = d_inner + 2 * n_qk * d_state
    cast = lambda a: a.astype(mxu_dtype)

    @pl.when(c == 0)
    def _():
        state_ref[...] = jnp.zeros_like(state_ref)
        halo_ref[...] = jnp.zeros_like(halo_ref)

    proj = proj_ref[0].astype(jnp.float32)                              # (T, d_in_proj)
    xBC = proj[:, :conv_dim]
    z = proj[:, conv_dim:conv_dim + d_inner]
    A_log = proj[:, conv_dim + d_inner:]                                # (T, n_v)

    # ---- causal depthwise conv1d (identity activation) with carried halo ----
    conv_w = conv_w_ref[...].astype(jnp.float32)                        # (d_conv, conv_dim)
    xpad = jnp.concatenate([halo_ref[...], xBC], axis=0)                # (T + d_conv - 1, conv_dim)
    halo_ref[...] = xpad[T:, :]                                         # carry last d_conv-1 rows
    acc = xBC * conv_w[d_conv - 1:d_conv, :]                            # current-step tap
    for k in range(d_conv - 1):
        acc = acc + xpad[k:k + T, :] * conv_w[k:k + 1, :]
    xBC_c = acc + conv_b_ref[...].astype(jnp.float32)

    # ---- split heads (n_qk == n_v assumed) ----
    off_b = d_inner
    off_c = d_inner + n_qk * d_state
    Xh = jnp.transpose(xBC_c[:, :d_inner].reshape(T, n_v, headdim), (1, 0, 2))      # (H, T, P)
    Bh = jnp.transpose(xBC_c[:, off_b:off_c].reshape(T, n_qk, d_state), (1, 0, 2))  # (H, T, N)
    Ch = jnp.transpose(xBC_c[:, off_c:].reshape(T, n_qk, d_state), (1, 0, 2))       # (H, T, N)

    # ---- decays: inclusive cumsum via (T,T)x(T,H) MXU matmul against the causal mask ----
    t_idx = lax.broadcasted_iota(jnp.int32, (T, T), 0)
    s_idx = lax.broadcasted_iota(jnp.int32, (T, T), 1)
    causal2d = t_idx >= s_idx                                           # (T, T), s <= t
    dt = _softplus(A_log)                                               # (T, H)
    cs = jnp.dot(causal2d.astype(jnp.float32), dt,
                 preferred_element_type=jnp.float32)                    # inclusive cumsum (T, H)
    csh = jnp.transpose(cs)                                             # (H, T)

    dlog = csh[:, None, :] - csh[:, :, None]                            # (H, T, T): cs_s - cs_t
    decay = jnp.where(causal2d[None, :, :],
                      jnp.exp(jnp.minimum(dlog, 0.0)), 0.0)             # clamp before exp

    # ---- intra-chunk term (all heads batched) ----
    CB = jnp.einsum('htn,hsn->hts', cast(Ch), cast(Bh),
                    preferred_element_type=jnp.float32)
    y = jnp.einsum('hts,hsp->htp', cast(decay * CB), cast(Xh),
                   preferred_element_type=jnp.float32)

    # ---- inter-chunk term from carried state ----
    state = state_ref[...]                                              # (H, P, N), f32
    seg = jnp.exp(-csh)[:, :, None]                                     # (H, T, 1)
    y = y + seg * jnp.einsum('htn,hpn->htp', cast(Ch), cast(state),
                             preferred_element_type=jnp.float32)

    # ---- D skip ----
    y = y + d_ref[...].reshape(n_v, 1, 1) * Xh

    # ---- carry state to next chunk (f32 scratch) ----
    cs_last = csh[:, T - 1:T]                                           # (H, 1)
    w_s = jnp.exp(csh - cs_last)[:, :, None]                            # (H, T, 1), <= 1
    state_ref[...] = (jnp.exp(-cs_last)[:, :, None] * state
                      + jnp.einsum('htp,htn->hpn', cast(Xh * w_s), cast(Bh),
                                   preferred_element_type=jnp.float32))

    # ---- z gate (out_proj + residual handled by the out_proj GEMM kernel) ----
    y_td = jnp.transpose(y, (1, 0, 2)).reshape(T, d_inner)
    gated = y_td * _silu(z + zb_ref[...].astype(jnp.float32))
    g_ref[0] = gated.astype(g_ref.dtype)


def out_proj_kernel(g_ref, w_ref, res_ref, o_ref, acc_ref):
    """out_proj GEMM (reduction over d_inner tiles) + fused residual add."""
    j = pl.program_id(1)

    @pl.when(j == 0)
    def _():
        acc_ref[...] = jnp.zeros_like(acc_ref)

    acc_ref[...] += jnp.dot(g_ref[...].astype(w_ref.dtype), w_ref[...],
                            preferred_element_type=jnp.float32)

    @pl.when(j == pl.num_programs(1) - 1)
    def _():
        o_ref[...] = (res_ref[...].astype(jnp.float32) + acc_ref[...]).astype(o_ref.dtype)


def mlp_kernel(x_ref, ln_ref, wgu_ref, wd_ref, o_ref, acc_ref, xn_ref, *, eps):
    """Fused post_attention RMSNorm + LlamaMLP (gate/up fused, intermediate-dim reduction)
    + residual add."""
    j = pl.program_id(1)

    @pl.when(j == 0)
    def _():
        x = x_ref[...].astype(jnp.float32)
        var = jnp.mean(x * x, axis=-1, keepdims=True)
        xn = x * lax.rsqrt(var + eps) * ln_ref[...].astype(jnp.float32)
        xn_ref[...] = xn.astype(xn_ref.dtype)
        acc_ref[...] = jnp.zeros_like(acc_ref)

    gu = jnp.dot(xn_ref[...], wgu_ref[...], preferred_element_type=jnp.float32)  # (TM, 2*TI)
    ti = gu.shape[-1] // 2
    h = (_silu(gu[:, :ti]) * gu[:, ti:]).astype(wd_ref.dtype)
    acc_ref[...] += jnp.dot(h, wd_ref[...], preferred_element_type=jnp.float32)

    @pl.when(j == pl.num_programs(1) - 1)
    def _():
        o_ref[...] = (x_ref[...].astype(jnp.float32) + acc_ref[...]).astype(o_ref.dtype)


# -------------------------------------- tiling helpers --------------------------------------
def _pick_chunk(L, target):
    c = min(target, L)
    if L % c == 0 and (c == L or c % 8 == 0):
        return c
    for t in range(min(target, L), 0, -1):
        if L % t == 0 and t % 8 == 0:
            return t
    return L


def _pick_row_tile(n, target):
    if n <= target:
        return n
    for t in range(min(target, n), 0, -1):
        if n % t == 0 and t % 8 == 0:
            return t
    return n


def _pick_k_tile(n, target):
    t = min(target, n)
    if t == n:
        return n
    t -= t % 128
    while t >= 128:
        if n % t == 0:
            return t
        t -= 128
    return n


# -------------------------------------- wrappers --------------------------------------
def prepare_params(p, cfg, *, mlp_inter_tile=512, compute_dtype=None):
    """Pre-transpose / reshape weights ONCE into kernel layout.

    compute_dtype (e.g. bf16) casts the GEMM weights (MXU operands); gate/up are fused into a
    single per-tile-interleaved (D, 2*inter) weight keyed to mlp_inter_tile.
    """
    cast = (lambda w: w.astype(compute_dtype)) if compute_dtype is not None else (lambda w: w)
    wgT = p["wg"].T                                  # (D, inter)
    wuT = p["wu"].T
    D, inter = wgT.shape
    TI = _pick_k_tile(inter, mlp_inter_tile)
    nj = inter // TI
    wgu = jnp.concatenate([wgT.reshape(D, nj, TI), wuT.reshape(D, nj, TI)],
                          axis=-1).reshape(D, 2 * inter)   # [g_0|u_0|g_1|u_1|...]
    return dict(
        ln1_w=p["ln1_w"].reshape(1, -1),
        ln2_w=p["ln2_w"].reshape(1, -1),
        w_in=cast(p["w_in"].T),            # (d_model, d_in_proj)
        w_out=cast(p["w_out"].T),          # (d_inner, d_model)
        conv_w=p["conv_w"].T,              # (d_conv, conv_dim)
        conv_b=p["conv_b"].reshape(1, -1),
        D=p["D"].reshape(1, -1),
        z_bias=p["z_bias"].reshape(1, -1),
        wgu=cast(wgu),                     # (d_model, 2*inter)
        wd=cast(p["wd"].T),                # (inter, d_model)
        mlp_ti=TI,
    )


def in_proj_call(x2d, kp, *, eps, tm_target, tk_target):
    M, D = x2d.shape
    d_in_proj = kp["w_in"].shape[1]
    TM = _pick_row_tile(M, tm_target)
    TK = _pick_k_tile(D, tk_target)
    return pl.pallas_call(
        functools.partial(in_proj_kernel, eps=eps),
        out_shape=jax.ShapeDtypeStruct((M, d_in_proj), jnp.float32),
        grid=(M // TM, D // TK),
        in_specs=[
            pl.BlockSpec((TM, D), lambda i, j: (i, 0)),          # full row (RMS statistic)
            pl.BlockSpec((TM, TK), lambda i, j: (i, j)),         # row x reduction tile
            pl.BlockSpec((1, TK), lambda i, j: (0, j)),          # ln1 weight tile
            pl.BlockSpec((TK, d_in_proj), lambda i, j: (j, 0)),  # streamed in_proj weight tile
        ],
        out_specs=pl.BlockSpec((TM, d_in_proj), lambda i, j: (i, 0)),
        scratch_shapes=[pltpu.VMEM((TM, 1), jnp.float32)],       # rsqrt scale per row
        compiler_params=_cp(("parallel", "arbitrary")),
    )(x2d, x2d, kp["ln1_w"], kp["w_in"])


def ssm_call(proj, kp, cfg, *, chunk, mxu_dtype):
    B, L, d_in_proj = proj.shape
    d_inner, n_qk, n_v = cfg["d_inner"], cfg["n_qk"], cfg["n_v"]
    d_state, d_conv, headdim = cfg["d_state"], cfg["d_conv"], cfg["headdim"]
    assert n_qk == n_v, "SSM kernel assumes n_qk == n_v"
    conv_dim = d_inner + 2 * n_qk * d_state
    assert d_in_proj == conv_dim + d_inner + n_v

    T = _pick_chunk(L, chunk)
    assert L % T == 0 and T >= d_conv - 1
    n_chunks = L // T

    kern = functools.partial(
        ssm_kernel, d_inner=d_inner, n_qk=n_qk, n_v=n_v, d_state=d_state,
        d_conv=d_conv, headdim=headdim, chunk=T, mxu_dtype=mxu_dtype)

    def resident(shape):
        return pl.BlockSpec(shape, lambda b, c: (0,) * len(shape))

    return pl.pallas_call(
        kern,
        out_shape=jax.ShapeDtypeStruct((B, L, d_inner), jnp.float32),
        grid=(B, n_chunks),
        in_specs=[
            pl.BlockSpec((1, T, d_in_proj), lambda b, c: (b, c, 0)),  # projected chunk
            resident((d_conv, conv_dim)),                             # conv weight
            resident((1, conv_dim)),                                  # conv bias
            resident((1, n_v)),                                       # D skip
            resident((1, d_inner)),                                   # z_bias
        ],
        out_specs=pl.BlockSpec((1, T, d_inner), lambda b, c: (b, c, 0)),
        scratch_shapes=[pltpu.VMEM((n_v, headdim, d_state), jnp.float32),  # carried SSM state
                        pltpu.VMEM((d_conv - 1, conv_dim), jnp.float32)],  # conv halo
        compiler_params=_cp(("parallel", "arbitrary")),
    )(proj, kp["conv_w"], kp["conv_b"], kp["D"], kp["z_bias"])


def out_proj_call(gated2d, res2d, kp, *, tm_target, tk_target):
    M, d_inner = gated2d.shape
    D = res2d.shape[1]
    TM = _pick_row_tile(M, tm_target)
    TK = _pick_k_tile(d_inner, tk_target)
    return pl.pallas_call(
        out_proj_kernel,
        out_shape=jax.ShapeDtypeStruct((M, D), res2d.dtype),
        grid=(M // TM, d_inner // TK),
        in_specs=[
            pl.BlockSpec((TM, TK), lambda i, j: (i, j)),   # gated activations tile
            pl.BlockSpec((TK, D), lambda i, j: (j, 0)),    # streamed out_proj weight tile
            pl.BlockSpec((TM, D), lambda i, j: (i, 0)),    # residual row tile
        ],
        out_specs=pl.BlockSpec((TM, D), lambda i, j: (i, 0)),
        scratch_shapes=[pltpu.VMEM((TM, D), jnp.float32)],
        compiler_params=_cp(("parallel", "arbitrary")),
    )(gated2d, kp["w_out"], res2d)


def mlp_call(x2d, kp, *, eps, tm_target):
    M, D = x2d.shape
    inter = kp["wd"].shape[0]
    TI = kp["mlp_ti"]
    TM = _pick_row_tile(M, tm_target)
    return pl.pallas_call(
        functools.partial(mlp_kernel, eps=eps),
        out_shape=jax.ShapeDtypeStruct((M, D), x2d.dtype),
        grid=(M // TM, inter // TI),
        in_specs=[
            pl.BlockSpec((TM, D), lambda i, j: (i, 0)),       # hs1 row tile (also residual)
            pl.BlockSpec((1, D), lambda i, j: (0, 0)),        # ln2 weight
            pl.BlockSpec((D, 2 * TI), lambda i, j: (0, j)),   # fused gate|up tile
            pl.BlockSpec((TI, D), lambda i, j: (j, 0)),       # down_proj tile (reduction over j)
        ],
        out_specs=pl.BlockSpec((TM, D), lambda i, j: (i, 0)),
        scratch_shapes=[pltpu.VMEM((TM, D), jnp.float32),        # down-proj accumulator
                        pltpu.VMEM((TM, D), kp["wgu"].dtype)],   # cached normed activations
        compiler_params=_cp(("parallel", "arbitrary")),
    )(x2d, kp["ln2_w"], kp["wgu"], kp["wd"])


def block_forward(hidden_states, kp, cfg, *, chunk=256, eps=1e-5,
                  row_tile=256, proj_k_tile=512, inner_k_tile=512, mlp_row_tile=512,
                  ssm_matmul_dtype=jnp.float32):
    """Pallas implementation of Block.forward -> outputs['hidden_states'].

    chunk=256 is the v6e/v7x default (256-wide MXU); use chunk=128 on v5e.
    """
    B, L, D = hidden_states.shape
    x2d = hidden_states.reshape(B * L, D)
    proj = in_proj_call(x2d, kp, eps=eps, tm_target=row_tile, tk_target=proj_k_tile)
    gated = ssm_call(proj.reshape(B, L, -1), kp, cfg, chunk=chunk, mxu_dtype=ssm_matmul_dtype)
    hs1 = out_proj_call(gated.reshape(B * L, -1), x2d, kp,
                        tm_target=row_tile, tk_target=inner_k_tile)
    out = mlp_call(hs1, kp, eps=eps, tm_target=mlp_row_tile)
    return out.reshape(B, L, D)


# ------------------------------ pure-JAX reference (sequential scan) ------------------------------
def block_reference(x, p, cfg):
    d_inner, n_qk, n_v = cfg["d_inner"], cfg["n_qk"], cfg["n_v"]
    d_state, d_conv, headdim = cfg["d_state"], cfg["d_conv"], cfg["headdim"]
    conv_dim = d_inner + 2 * n_qk * d_state
    Bsz, L, D = x.shape
    hp = lax.Precision.HIGHEST

    def rms(h, w):
        hf = h.astype(jnp.float32)
        var = jnp.mean(hf * hf, axis=-1, keepdims=True)
        return (w * (hf * lax.rsqrt(var + 1e-5))).astype(h.dtype)

    residual = x
    hs = rms(x, p["ln1_w"])
    proj = jnp.einsum("bld,pd->blp", hs, p["w_in"], precision=hp)
    xBC = proj[..., :conv_dim]
    z = proj[..., conv_dim:conv_dim + d_inner]
    A_log = proj[..., conv_dim + d_inner:]
    xpad = jnp.pad(xBC, ((0, 0), (d_conv - 1, 0), (0, 0)))
    xc = sum(xpad[:, k:k + L, :] * p["conv_w"][:, k] for k in range(d_conv)) + p["conv_b"]
    xh = xc[..., :d_inner].reshape(Bsz, L, n_v, headdim)
    Bm = xc[..., d_inner:d_inner + n_qk * d_state].reshape(Bsz, L, n_qk, d_state)
    Cm = xc[..., d_inner + n_qk * d_state:].reshape(Bsz, L, n_qk, d_state)
    dt = _softplus(A_log)
    dec = jnp.exp(-dt)

    def step(hstate, inp):
        d_t, x_t, b_t, c_t = inp
        hstate = hstate * d_t[..., None, None] + x_t[..., :, None] * b_t[..., None, :]
        y_t = jnp.einsum("bhn,bhpn->bhp", c_t, hstate, precision=hp)
        return hstate, y_t

    h0 = jnp.zeros((Bsz, n_v, headdim, d_state), jnp.float32)
    inputs = (jnp.moveaxis(dec, 1, 0), jnp.moveaxis(xh, 1, 0),
              jnp.moveaxis(Bm, 1, 0), jnp.moveaxis(Cm, 1, 0))
    _, ys = lax.scan(step, h0, inputs)
    y = jnp.moveaxis(ys, 0, 1) + p["D"][None, None, :, None] * xh
    y = y.reshape(Bsz, L, d_inner)
    gated = y * _silu(z + p["z_bias"])
    mix_out = jnp.einsum("bli,di->bld", gated, p["w_out"], precision=hp)
    hs1 = residual + mix_out
    hs2 = rms(hs1, p["ln2_w"])
    g = jnp.einsum("bld,id->bli", hs2, p["wg"], precision=hp)
    u = jnp.einsum("bld,id->bli", hs2, p["wu"], precision=hp)
    mlp_out = jnp.einsum("bli,di->bld", _silu(g) * u, p["wd"], precision=hp)
    return hs1 + mlp_out


# -------------------------------------------- main --------------------------------------------
if __name__ == "__main__":
    key = jax.random.PRNGKey(0)
    B, L = 2, 32
    d_model = 256
    d_inner = 256                     # expand = 1
    n_qk = n_v = 8
    d_state = 32
    headdim = d_inner // n_v
    d_conv = 4
    inter = 512
    d_in_proj = 2 * d_inner + 2 * n_qk * d_state + n_v     # = 1032
    conv_dim = d_inner + 2 * n_qk * d_state                # = 768
    cfg = dict(d_inner=d_inner, n_qk=n_qk, n_v=n_v, d_state=d_state,
               d_conv=d_conv, headdim=headdim)

    ks = jax.random.split(key, 12)
    p = dict(
        ln1_w=1.0 + 0.02 * jax.random.normal(ks[0], (d_model,), jnp.float32),
        ln2_w=1.0 + 0.02 * jax.random.normal(ks[1], (d_model,), jnp.float32),
        w_in=0.1 * jax.random.normal(ks[2], (d_in_proj, d_model), jnp.float32),
        w_out=0.1 * jax.random.normal(ks[3], (d_model, d_inner), jnp.float32),
        conv_w=0.2 * jax.random.normal(ks[4], (conv_dim, d_conv), jnp.float32),
        conv_b=0.05 * jax.random.normal(ks[5], (conv_dim,), jnp.float32),
        D=jnp.ones((n_v,), jnp.float32) + 0.05 * jax.random.normal(ks[6], (n_v,), jnp.float32),
        z_bias=0.05 * jax.random.normal(ks[7], (d_inner,), jnp.float32),
        wg=0.1 * jax.random.normal(ks[8], (inter, d_model), jnp.float32),
        wu=0.1 * jax.random.normal(ks[9], (inter, d_model), jnp.float32),
        wd=0.1 * jax.random.normal(ks[10], (d_model, inter), jnp.float32),
    )
    x = jax.random.normal(ks[11], (B, L, d_model), jnp.float32)

    # Small tiles so that every reduction / chunk-carry grid axis takes >1 step at toy shapes.
    tiling = dict(chunk=8, row_tile=32, proj_k_tile=128, inner_k_tile=128, mlp_row_tile=32)

    # ---- f32 path, checked tightly against the sequential-scan reference ----
    kp32 = prepare_params(p, cfg, mlp_inter_tile=256)
    out32 = jax.block_until_ready(block_forward(x, kp32, cfg, **tiling))
    ref = jax.block_until_ready(block_reference(x, p, cfg))
    assert out32.shape == (B, L, d_model)
    assert bool(jnp.all(jnp.isfinite(out32)))
    np.testing.assert_allclose(np.asarray(out32), np.asarray(ref), atol=3e-3, rtol=3e-3)

    # ---- bf16 MXU-operand path (weights + SSM einsum operands bf16, f32 accumulation),
    #      checked loosely against a reference run with bf16-rounded GEMM weights ----
    kp16 = prepare_params(p, cfg, mlp_inter_tile=256, compute_dtype=jnp.bfloat16)
    out16 = jax.block_until_ready(
        block_forward(x, kp16, cfg, ssm_matmul_dtype=jnp.bfloat16, **tiling))
    p16 = dict(p)
    for k in ("w_in", "w_out", "wg", "wu", "wd"):
        p16[k] = p[k].astype(jnp.bfloat16).astype(jnp.float32)
    ref16 = jax.block_until_ready(block_reference(x, p16, cfg))
    assert bool(jnp.all(jnp.isfinite(out16)))
    rel = float(jnp.linalg.norm(out16 - ref16) / jnp.linalg.norm(ref16))
    assert rel < 0.1, f"bf16 relative L2 error too large: {rel}"

    print("KERNEL_OK")
</pallas_src>

<mosaic_0001>
module attributes {stable_mosaic.version = 11 : i64} {
  func.func @in_proj_kernel(%arg0: i32, %arg1: i32, %arg2: memref<32x256xf32, #tpu.memory_space<vmem>>, %arg3: memref<32x128xf32, #tpu.memory_space<vmem>>, %arg4: memref<1x128xf32, #tpu.memory_space<vmem>>, %arg5: memref<128x1032xf32, #tpu.memory_space<vmem>>, %arg6: memref<32x1032xf32, #tpu.memory_space<vmem>>, %arg7: memref<32x1xf32, #tpu.memory_space<vmem>>) attributes {dimension_semantics = [#tpu.dimension_semantics<parallel>, #tpu.dimension_semantics<arbitrary>], iteration_bounds = array<i64: 2, 2>, scalar_prefetch = 0 : i64, scratch_operands = 1 : i64, tpu.core_type = #tpu.core_type<tc>, window_params = [{transform_indices = @transform_0, window_bounds = array<i64: 32, 256>}, {transform_indices = @transform_1, window_bounds = array<i64: 32, 128>}, {transform_indices = @transform_2, window_bounds = array<i64: 1, 128>}, {transform_indices = @transform_3, window_bounds = array<i64: 128, 1032>}, {transform_indices = @transform_4, window_bounds = array<i64: 32, 1032>}]} {
    %c0_i32 = arith.constant 0 : i32
    %0 = arith.cmpi eq, %arg1, %c0_i32 : i32
    %1 = arith.extui %0 : i1 to i32
    %c0_i32_0 = arith.constant 0 : i32
    %2 = arith.cmpi ne, %1, %c0_i32_0 : i32
    scf.if %2 {
      %c0_12 = arith.constant 0 : index
      %c0_13 = arith.constant 0 : index
      %15 = vector.load %arg2[%c0_12, %c0_13] : memref<32x256xf32, #tpu.memory_space<vmem>>, vector<32x256xf32>
      %16 = arith.mulf %15, %15 : vector<32x256xf32>
      %cst_14 = arith.constant dense<0.000000e+00> : vector<32xf32>
      %17 = vector.multi_reduction <add>, %16, %cst_14 [1] : vector<32x256xf32> to vector<32xf32>
      %18 = vector.shape_cast %17 : vector<32xf32> to vector<32x1xf32>
      %cst_15 = arith.constant 2.560000e+02 : f32
      %19 = vector.broadcast %cst_15 : f32 to vector<32x1xf32>
      %20 = arith.divf %18, %19 : vector<32x1xf32>
      %cst_16 = arith.constant 9.99999974E-6 : f32
      %21 = vector.broadcast %cst_16 : f32 to vector<32x1xf32>
      %22 = arith.addf %20, %21 : vector<32x1xf32>
      %23 = math.rsqrt %22 : vector<32x1xf32>
      %c0_17 = arith.constant 0 : index
      %c0_18 = arith.constant 0 : index
      %24 = vector.load %arg7[%c0_17, %c0_18] : memref<32x1xf32, #tpu.memory_space<vmem>>, vector<32x1xf32>
      tpu.vector_store %arg7[%c0_17, %c0_18], %23 {strides = array<i32>} : memref<32x1xf32, #tpu.memory_space<vmem>>, vector<32x1xf32>,
      %cst_19 = arith.constant 0.000000e+00 : f32
      %25 = vector.broadcast %cst_19 : f32 to vector<32x1032xf32>
      %c0_20 = arith.constant 0 : index
      %c0_21 = arith.constant 0 : index
      %26 = vector.load %arg6[%c0_20, %c0_21] : memref<32x1032xf32, #tpu.memory_space<vmem>>, vector<32x1032xf32>
      tpu.vector_store %arg6[%c0_20, %c0_21], %25 {strides = array<i32>} : memref<32x1032xf32, #tpu.memory_space<vmem>>, vector<32x1032xf32>,
    } else {
    }
    %c0 = arith.constant 0 : index
    %c0_1 = arith.constant 0 : index
    %3 = vector.load %arg3[%c0, %c0_1] : memref<32x128xf32, #tpu.memory_space<vmem>>, vector<32x128xf32>
    %c0_2 = arith.constant 0 : index
    %c0_3 = arith.constant 0 : index
    %4 = vector.load %arg7[%c0_2, %c0_3] : memref<32x1xf32, #tpu.memory_space<vmem>>, vector<32x1xf32>
    %5 = vector.broadcast %4 : vector<32x1xf32> to vector<32x128xf32>
    %6 = arith.mulf %3, %5 : vector<32x128xf32>
    %c0_4 = arith.constant 0 : index
    %c0_5 = arith.constant 0 : index
    %7 = vector.load %arg4[%c0_4, %c0_5] : memref<1x128xf32, #tpu.memory_space<vmem>>, vector<1x128xf32>
    %8 = vector.broadcast %7 : vector<1x128xf32> to vector<32x128xf32>
    %9 = arith.mulf %6, %8 : vector<32x128xf32>
    %c0_6 = arith.constant 0 : index
    %c0_7 = arith.constant 0 : index
    %10 = vector.load %arg6[%c0_6, %c0_7] : memref<32x1032xf32, #tpu.memory_space<vmem>>, vector<32x1032xf32>
    %c0_8 = arith.constant 0 : index
    %c0_9 = arith.constant 0 : index
    %11 = vector.load %arg5[%c0_8, %c0_9] : memref<128x1032xf32, #tpu.memory_space<vmem>>, vector<128x1032xf32>
    %cst = arith.constant dense<0.000000e+00> : vector<32x1032xf32>
    %12 = tpu.matmul %9, %11, %cst {dimension_numbers = #tpu.dot_dimension_numbers<[1], [0], [0], [1], [0, 0, 1, 1], [], []>} : vector<32x128xf32>, vector<128x1032xf32>, vector<32x1032xf32> -> vector<32x1032xf32>
    %13 = arith.addf %10, %12 : vector<32x1032xf32>
    %c0_10 = arith.constant 0 : index
    %c0_11 = arith.constant 0 : index
    %14 = vector.load %arg6[%c0_10, %c0_11] : memref<32x1032xf32, #tpu.memory_space<vmem>>, vector<32x1032xf32>
    tpu.vector_store %arg6[%c0_10, %c0_11], %13 {strides = array<i32>} : memref<32x1032xf32, #tpu.memory_space<vmem>>, vector<32x1032xf32>,
    return
  }
  func.func @transform_0(%arg0: i32, %arg1: i32) -> (i32, i32) {
    %c0_i32 = arith.constant 0 : i32
    %c0_i32_0 = arith.constant 0 : i32
    return %arg0, %c0_i32 : i32, i32
  }
  func.func @transform_1(%arg0: i32, %arg1: i32) -> (i32, i32) {
    %c0_i32 = arith.constant 0 : i32
    return %arg0, %arg1 : i32, i32
  }
  func.func @transform_2(%arg0: i32, %arg1: i32) -> (i32, i32) {
    %c0_i32 = arith.constant 0 : i32
    %c0_i32_0 = arith.constant 0 : i32
    return %c0_i32, %arg1 : i32, i32
  }
  func.func @transform_3(%arg0: i32, %arg1: i32) -> (i32, i32) {
    %c0_i32 = arith.constant 0 : i32
    %c0_i32_0 = arith.constant 0 : i32
    return %arg1, %c0_i32 : i32, i32
  }
  func.func @transform_4(%arg0: i32, %arg1: i32) -> (i32, i32) {
    %c0_i32 = arith.constant 0 : i32
    %c0_i32_0 = arith.constant 0 : i32
    return %arg0, %c0_i32 : i32, i32
  }
}

</mosaic_0001>

<llo_original>
// kernel: tpu_custom_call.1
$region0: #{tpu_custom_call.1}
  #allocation0 [shape = 'u32[]', space=smem, size = 0x4, offset = 0x4, fixed_abs, tag = 'smem constant byte address 0x4 - core index']
  #allocation1 [shape = 'u32[144,128]{1,0:T(1,128)}', space=vmem, size = 0x12000, scoped, tag = 'internal scratch']
  #allocation2 [shape = 'f32[32,1]{1,0:T(8,128)}', space=vmem, size = 0x4000, scoped, tag = 'scratch operand']
  %s0 = inlined_call_operand.hbm [shape: f32[64,256], index: 0, kind: input, shape index: {}]
  %s1 = inlined_call_operand.hbm [shape: f32[64,256], index: 1, kind: input, shape index: {}]
  %s2 = inlined_call_operand.hbm [shape: f32[1,256], index: 2, kind: input, shape index: {}]
  %s3 = inlined_call_operand.hbm [shape: f32[256,1032], index: 3, kind: input, shape index: {}]
  %s4 = inlined_call_operand.hbm [shape: f32[64,1032], index: 4, kind: output, shape index: {}]
  %s5 = sld [smem:[#allocation0]]
  $region69: #{tpu_custom_call.1} parent=0
    _
  %s7 = ssub.s32 1, %s5
  %s8 = scalar_select 0, %s7, %s5
  $region1: #{tpu_custom_call.1} parent=0
    #allocation3 [shape = 'u8[65536]{0}', space=vmem, size = 0x10000, scoped, tag = 'input window, operand 0']
    #allocation4 [shape = 's32[2]{0}', space=sflag, size = 0x8, scoped, tag = 'scoped memory for tpu_custom_call.1']
    #allocation5 [shape = 's32[2]{0}', space=sflag, size = 0x8, scoped, tag = 'scoped memory for tpu_custom_call.1']
    #allocation6 [shape = 'u8[32768]{0}', space=vmem, size = 0x8000, scoped, tag = 'input window, operand 1']
    #allocation7 [shape = 's32[2]{0}', space=sflag, size = 0x8, scoped, tag = 'scoped memory for tpu_custom_call.1']
    #allocation8 [shape = 'u8[1024]{0}', space=vmem, size = 0x400, scoped, tag = 'input window, operand 2']
    #allocation9 [shape = 'u8[1179648]{0}', space=vmem, size = 0x120000, scoped, tag = 'input window, operand 3']
    #allocation10 [shape = 's32[2]{0}', space=sflag, size = 0x8, scoped, tag = 'scoped memory for tpu_custom_call.1']
    #allocation11 [shape = 'u8[294912]{0}', space=vmem, size = 0x48000, scoped, tag = 'output window, operand 0']
    %9 = vsyncpa [#allocation4], 0
    %s10 = scalar_lea.sflag [#allocation4], 1
    %11 = vsyncpa %s10, 0
    %12 = vsyncpa [#allocation7], 0
    %s13 = scalar_lea.sflag [#allocation7], 1
    %14 = vsyncpa %s13, 0
    %15 = vsyncpa [#allocation10], 0
    %s16 = scalar_lea.sflag [#allocation10], 1
    %17 = vsyncpa %s16, 0
    %18 = vsyncpa [#allocation5], 0
    %s19 = scalar_lea.sflag [#allocation5], 1
    %20 = vsyncpa %s19, 0
    loop: start=0, step=1, limit=6
    $region2: #{tpu_custom_call.1} parent=1 // loop_pre_header
      _
    $region3: #{tpu_custom_call.1} parent=1 // loop_header
      %s22 = sphi 0, %s26
      %p23 = scmp.ge.s32.totalorder %s22, 6
      %s29 = sphi 0, %s41
      %s30 = sphi 0, %s37
      %s31 = sphi 0, %s29
      %s32 = sphi 0, %s30
      %s33 = sphi 0, %s31
      %s34 = sphi 0, %s32
      %s44 = sphi 0, %s46
      %s47 = sphi 0, %s44
      %s48 = sphi 0, %s47
      %s64 = sphi 0, %s48
      %s72 = sphi 0, %s74
      %s75 = sphi 0, %s72
      %s76 = sphi 0, %s75
      %s92 = sphi 0, %s76
      %s98 = sphi 0, %s100
      %s101 = sphi 0, %s98
      %s102 = sphi 0, %s101
      %s118 = sphi 0, %s102
      %s124 = sphi 0, %s126
      %s127 = sphi 0, %s124
      %s128 = sphi 0, %s127
      %s144 = sphi 0, %s128
      %s150 = sphi 0, %s152
      %s153 = sphi 0, %s150
      %s154 = sphi 0, %s153
      %s170 = sphi 0, %s154
    $region4: #{tpu_custom_call.1} parent=1 // loop_header_branch
      %25 = sbr.rel (%p23) target = $region8
    $region5: #{tpu_custom_call.1} parent=1 // loop_body
      %s27 = ssub.s32 %s22, 1
      %s28 = ssub.s32 %s22, 2
      %s35 = sadd.s32 1, %s30
      %p36 = scmp.ge.s32.totalorder %s35, 2
      %s37 = scalar_select %p36, 0, %s35
      %s38 = sadd.s32 1, %s29
      %s39 = scalar_select %p36, %s38, %s29
      %p40 = scmp.ge.s32.totalorder %s39, 2
      %s41 = scalar_select %p40, 0, %s39
      %s42 = ssub.s32 %s29, %s41
      %p43 = scmp.eq.s32.totalorder %s42, 0
      %s45 = sadd.s32 %s44, 1
      %s46 = scalar_select %p43, %s44, %s45
      %p49 = pneg %p43
      %p50 = scmp.eq.s32.totalorder %s22, 3
      %p51 = por %p49, %p50
      %p52 = scmp.ne.s32.totalorder %s44, %s47
      %p53 = scmp.eq.s32.totalorder %s22, 0
      %p54 = por %p52, %p53
      %p55 = scmp.ne.s32.totalorder %s44, %s47
      %p56 = scmp.eq.s32.totalorder %s27, 3
      %p57 = por %p55, %p56
      %p58 = scmp.ne.s32.totalorder %s47, %s48
      %p59 = scmp.eq.s32.totalorder %s27, 0
      %p60 = por %p58, %p59
      %p61 = scmp.ne.s32.totalorder %s47, %s48
      %p62 = scmp.eq.s32.totalorder %s28, 3
      %p63 = por %p61, %p62
      %p65 = scmp.ne.s32.totalorder %s48, %s64
      %p66 = scmp.eq.s32.totalorder %s28, 0
      %p67 = por %p65, %p66
      %s68 = ssub.s32 %s29, %s41
      %s69 = ssub.s32 %s30, %s37
      %s70 = sor.u32 %s68, %s69
      %p71 = scmp.eq.s32.totalorder %s70, 0
      %s73 = sadd.s32 %s72, 1
      %s74 = scalar_select %p71, %s72, %s73
      %p77 = pneg %p71
      %p78 = scmp.eq.s32.totalorder %s22, 3
      %p79 = por %p77, %p78
      %p80 = scmp.ne.s32.totalorder %s72, %s75
      %p81 = scmp.eq.s32.totalorder %s22, 0
      %p82 = por %p80, %p81
      %p83 = scmp.ne.s32.totalorder %s72, %s75
      %p84 = scmp.eq.s32.totalorder %s27, 3
      %p85 = por %p83, %p84
      %p86 = scmp.ne.s32.totalorder %s75, %s76
      %p87 = scmp.eq.s32.totalorder %s27, 0
      %p88 = por %p86, %p87
      %p89 = scmp.ne.s32.totalorder %s75, %s76
      %p90 = scmp.eq.s32.totalorder %s28, 3
      %p91 = por %p89, %p90
      %p93 = scmp.ne.s32.totalorder %s76, %s92
      %p94 = scmp.eq.s32.totalorder %s28, 0
      %p95 = por %p93, %p94
      %s96 = ssub.s32 %s30, %s37
      %p97 = scmp.eq.s32.totalorder %s96, 0
      %s99 = sadd.s32 %s98, 1
      %s100 = scalar_select %p97, %s98, %s99
      %p103 = pneg %p97
      %p104 = scmp.eq.s32.totalorder %s22, 3
      %p105 = por %p103, %p104
      %p106 = scmp.ne.s32.totalorder %s98, %s101
      %p107 = scmp.eq.s32.totalorder %s22, 0
      %p108 = por %p106, %p107
      %p109 = scmp.ne.s32.totalorder %s98, %s101
      %p110 = scmp.eq.s32.totalorder %s27, 3
      %p111 = por %p109, %p110
      %p112 = scmp.ne.s32.totalorder %s101, %s102
      %p113 = scmp.eq.s32.totalorder %s27, 0
      %p114 = por %p112, %p113
      %p115 = scmp.ne.s32.totalorder %s101, %s102
      %p116 = scmp.eq.s32.totalorder %s28, 3
      %p117 = por %p115, %p116
      %p119 = scmp.ne.s32.totalorder %s102, %s118
      %p120 = scmp.eq.s32.totalorder %s28, 0
      %p121 = por %p119, %p120
      %s122 = ssub.s32 %s30, %s37
      %p123 = scmp.eq.s32.totalorder %s122, 0
      %s125 = sadd.s32 %s124, 1
      %s126 = scalar_select %p123, %s124, %s125
      %p129 = pneg %p123
      %p130 = scmp.eq.s32.totalorder %s22, 3
      %p131 = por %p129, %p130
      %p132 = scmp.ne.s32.totalorder %s124, %s127
      %p133 = scmp.eq.s32.totalorder %s22, 0
      %p134 = por %p132, %p133
      %p135 = scmp.ne.s32.totalorder %s124, %s127
      %p136 = scmp.eq.s32.totalorder %s27, 3
      %p137 = por %p135, %p136
      %p138 = scmp.ne.s32.totalorder %s127, %s128
      %p139 = scmp.eq.s32.totalorder %s27, 0
      %p140 = por %p138, %p139
      %p141 = scmp.ne.s32.totalorder %s127, %s128
      %p142 = scmp.eq.s32.totalorder %s28, 3
      %p143 = por %p141, %p142
      %p145 = scmp.ne.s32.totalorder %s128, %s144
      %p146 = scmp.eq.s32.totalorder %s28, 0
      %p147 = por %p145, %p146
      %s148 = ssub.s32 %s29, %s41
      %p149 = scmp.eq.s32.totalorder %s148, 0
      %s151 = sadd.s32 %s150, 1
      %s152 = scalar_select %p149, %s150, %s151
      %p155 = pneg %p149
      %p156 = scmp.eq.s32.totalorder %s22, 3
      %p157 = por %p155, %p156
      %p158 = scmp.ne.s32.totalorder %s150, %s153
      %p159 = scmp.eq.s32.totalorder %s22, 0
      %p160 = por %p158, %p159
      %p161 = scmp.ne.s32.totalorder %s150, %s153
      %p162 = scmp.eq.s32.totalorder %s27, 3
      %p163 = por %p161, %p162
      %p164 = scmp.ne.s32.totalorder %s153, %s154
      %p165 = scmp.eq.s32.totalorder %s27, 0
      %p166 = por %p164, %p165
      %p167 = scmp.ne.s32.totalorder %s153, %s154
      %p168 = scmp.eq.s32.totalorder %s28, 3
      %p169 = por %p167, %p168
      %p171 = scmp.ne.s32.totalorder %s154, %s170
      %p172 = scmp.eq.s32.totalorder %s28, 0
      %p173 = por %p171, %p172
      %p174 = scmp.le.s32.totalorder 1, %s22
      %p175 = scmp.lt.s32.totalorder %s22, 5
      %p176 = pnand %p174, %p175
      %p177 = pneg %p176
      // Predicated region
      $region9: #{tpu_custom_call.1} parent=5 // pred_check
        _
      $region10: #{tpu_custom_call.1} parent=5 // pred_check_branch
        %179 = sbr.rel (%p176) target = $region12
      $region11: #{tpu_custom_call.1} parent=5 // pred_region
        %s180 = ssub.s32 %s22, 1
      $region12: #{tpu_custom_call.1} parent=5 // pred_fallthru
        _
      %p181 = scmp.lt.s32.totalorder %s22, 4
      // Predicated region
      $region13: #{tpu_custom_call.1} parent=5 // pred_check
        %p182 = pneg %p181
      $region14: #{tpu_custom_call.1} parent=5 // pred_check_branch
        %184 = sbr.rel (%p182) target = $region16
      $region15: #{tpu_custom_call.1} parent=5 // pred_region
        // Predicated region
        $region17: #{tpu_custom_call.1} parent=15 // pred_check
          %p185 = pneg %p54
        $region18: #{tpu_custom_call.1} parent=15 // pred_check_branch
          %187 = sbr.rel (%p185) target = $region20
        $region19: #{tpu_custom_call.1} parent=15 // pred_region
          %s188 = sand.u32 %s44, 1
          %s189 = scalar_lea.sflag [#allocation4], %s188
          %s190 = sand.u32 %s44, 1
          %s191 = smul.addr %s190, 64
          %s192 = scalar_lea.vmem [#allocation3], %s191
          %s193 = smul.u32 4, %s29
          %s195 = ssub.s32 1024, 1024
          %196 = vsyncadd %s189, %s195
          %s197 = smul.addr %s193, 2
          %s198 = smul.addr %s197, 128
          %s199 = scalar_lea.hbm %s0, %s198
          %s200 = sshll.u32 %s192, 4
          %s201 = int_to_ptr.vmem [resolvable:$true] %s200
          %206 = dma.hbm_to_vmem [thread:$0]  %s199, 1024, %s201, %s189, 256, 256, 16
        $region20: #{tpu_custom_call.1} parent=15 // pred_fallthru
          _
        // Predicated region
        $region21: #{tpu_custom_call.1} parent=15 // pred_check
          %p207 = pneg %p82
        $region22: #{tpu_custom_call.1} parent=15 // pred_check_branch
          %209 = sbr.rel (%p207) target = $region24
        $region23: #{tpu_custom_call.1} parent=15 // pred_region
          %s210 = sand.u32 %s22, 1
          %s211 = scalar_lea.sflag [#allocation7], %s210
          %s212 = sand.u32 %s72, 1
          %s213 = smul.addr %s212, 32
          %s214 = scalar_lea.vmem [#allocation6], %s213
          %s215 = smul.u32 4, %s29
          %s217 = ssub.s32 512, 512
          %218 = vsyncadd %s211, %s217
          %s219 = smul.addr %s215, 2
          %s220 = sadd.s32 %s30, %s219
          %s221 = smul.addr %s220, 128
          %s222 = scalar_lea.hbm %s1, %s221
          %s223 = sshll.u32 %s214, 4
          %s224 = int_to_ptr.vmem [resolvable:$true] %s223
          %229 = dma.hbm_to_vmem [thread:$0]  %s222, 512, %s224, %s211, 256, 128, 8
        $region24: #{tpu_custom_call.1} parent=15 // pred_fallthru
          _
        // Predicated region
        $region25: #{tpu_custom_call.1} parent=15 // pred_check
          %p230 = pneg %p108
        $region26: #{tpu_custom_call.1} parent=15 // pred_check_branch
          %232 = sbr.rel (%p230) target = $region28
        $region27: #{tpu_custom_call.1} parent=15 // pred_region
          %s233 = sand.u32 %s22, 1
          %s234 = scalar_lea.sflag [#allocation7], %s233
          %s235 = sand.u32 %s98, 1
          %s236 = scalar_lea.vmem [#allocation8], %s235
          %s238 = ssub.s32 16, 16
          %239 = vsyncadd %s234, %s238
          %s240 = smul.addr %s30, 16
          %s241 = scalar_lea.hbm %s2, %s240
          %s243 = sshll.u32 %s236, 4
          %s244 = int_to_ptr.vmem [resolvable:$true] %s243
          %246 = dma.hbm_to_vmem [thread:$0]  %s241, 16, %s244, %s234
        $region28: #{tpu_custom_call.1} parent=15 // pred_fallthru
          _
        // Predicated region
        $region29: #{tpu_custom_call.1} parent=15 // pred_check
          %p247 = pneg %p134
        $region30: #{tpu_custom_call.1} parent=15 // pred_check_branch
          %249 = sbr.rel (%p247) target = $region32
        $region31: #{tpu_custom_call.1} parent=15 // pred_region
          %s250 = sand.u32 %s124, 1
          %s251 = scalar_lea.sflag [#allocation10], %s250
          %s252 = sand.u32 %s124, 1
          %s253 = smul.addr %s252, 1152
          %s254 = scalar_lea.vmem [#allocation9], %s253
          %s255 = smul.u32 16, %s30
          %s257 = ssub.s32 18432, 18432
          %258 = vsyncadd %s251, %s257
          %s259 = smul.addr %s255, 9
          %s260 = smul.addr %s259, 128
          %s261 = scalar_lea.hbm %s3, %s260
          %s262 = sshll.u32 %s254, 4
          %s263 = int_to_ptr.vmem [resolvable:$true] %s262
          %268 = dma.hbm_to_vmem [thread:$0]  %s261, 18432, %s263, %s251, 1152, 1152, 72
        $region32: #{tpu_custom_call.1} parent=15 // pred_fallthru
          _
      $region16: #{tpu_custom_call.1} parent=5 // pred_fallthru
        _
      %p269 = scmp.le.s32.totalorder 1, %s22
      %p270 = scmp.lt.s32.totalorder %s22, 5
      %p271 = pnand %p269, %p270
      %p272 = pneg %p271
      // Predicated region
      $region33: #{tpu_custom_call.1} parent=5 // pred_check
        _
      $region34: #{tpu_custom_call.1} parent=5 // pred_check_branch
        %274 = sbr.rel (%p271) target = $region36
      $region35: #{tpu_custom_call.1} parent=5 // pred_region
        %s275 = ssub.s32 %s22, 1
        %s276 = sand.u32 %s47, 1
        %s277 = scalar_lea.sflag [#allocation4], %s276
        %s278 = sand.u32 %s47, 1
        %s279 = smul.addr %s278, 64
        %s280 = scalar_lea.vmem [#allocation3], %s279
        // Predicated region
        $region37: #{tpu_custom_call.1} parent=35 // pred_check
          %p281 = pneg %p60
        $region38: #{tpu_custom_call.1} parent=35 // pred_check_branch
          %283 = sbr.rel (%p281) target = $region40
        $region39: #{tpu_custom_call.1} parent=35 // pred_region
          %284 = dma.done %s277, 1024
        $region40: #{tpu_custom_call.1} parent=35 // pred_fallthru
          _
        %s285 = sand.u32 %s27, 1
        %s286 = scalar_lea.sflag [#allocation7], %s285
        %s287 = sand.u32 %s75, 1
        %s288 = smul.addr %s287, 32
        %s289 = scalar_lea.vmem [#allocation6], %s288
        // Predicated region
        $region41: #{tpu_custom_call.1} parent=35 // pred_check
          %p290 = pneg %p88
        $region42: #{tpu_custom_call.1} parent=35 // pred_check_branch
          %292 = sbr.rel (%p290) target = $region44
        $region43: #{tpu_custom_call.1} parent=35 // pred_region
          %293 = dma.done %s286, 512
        $region44: #{tpu_custom_call.1} parent=35 // pred_fallthru
          _
        %s294 = sand.u32 %s27, 1
        %s295 = scalar_lea.sflag [#allocation7], %s294
        %s296 = sand.u32 %s101, 1
        %s297 = scalar_lea.vmem [#allocation8], %s296
        // Predicated region
        $region45: #{tpu_custom_call.1} parent=35 // pred_check
          %p298 = pneg %p114
        $region46: #{tpu_custom_call.1} parent=35 // pred_check_branch
          %300 = sbr.rel (%p298) target = $region48
        $region47: #{tpu_custom_call.1} parent=35 // pred_region
          %301 = dma.done %s295, 16
        $region48: #{tpu_custom_call.1} parent=35 // pred_fallthru
          _
        %s302 = sand.u32 %s127, 1
        %s303 = scalar_lea.sflag [#allocation10], %s302
        %s304 = sand.u32 %s127, 1
        %s305 = smul.addr %s304, 1152
        %s306 = scalar_lea.vmem [#allocation9], %s305
        // Predicated region
        $region49: #{tpu_custom_call.1} parent=35 // pred_check
          %p307 = pneg %p140
        $region50: #{tpu_custom_call.1} parent=35 // pred_check_branch
          %309 = sbr.rel (%p307) target = $region52
        $region51: #{tpu_custom_call.1} parent=35 // pred_region
          %310 = dma.done %s303, 18432
        $region52: #{tpu_custom_call.1} parent=35 // pred_fallthru
          _
        %s311 = sand.u32 %s47, 1
        %s312 = scalar_lea.sflag [#allocation4], %s311
        %s313 = sand.u32 %s47, 1
        %s314 = smul.addr %s313, 64
        %s315 = scalar_lea.vmem [#allocation3], %s314
        %p316 = pneg %p60
        %p317 = pneg %p57
        %s318 = sand.u32 %s27, 1
        %s319 = scalar_lea.sflag [#allocation7], %s318
        %s320 = sand.u32 %s75, 1
        %s321 = smul.addr %s320, 32
        %s322 = scalar_lea.vmem [#allocation6], %s321
        %p323 = pneg %p88
        %p324 = pneg %p85
        %s325 = sand.u32 %s27, 1
        %s326 = scalar_lea.sflag [#allocation7], %s325
        %s327 = sand.u32 %s101, 1
        %s328 = scalar_lea.vmem [#allocation8], %s327
        %p329 = pneg %p114
        %p330 = pneg %p111
        %s331 = sand.u32 %s127, 1
        %s332 = scalar_lea.sflag [#allocation10], %s331
        %s333 = sand.u32 %s127, 1
        %s334 = smul.addr %s333, 1152
        %s335 = scalar_lea.vmem [#allocation9], %s334
        %p336 = pneg %p140
        %p337 = pneg %p137
        %p338 = pneg %p166
        %p339 = pneg %p163
        %s340 = sand.u32 %s153, 1
        %s341 = scalar_lea.sflag [#allocation5], %s340
        %s342 = sand.u32 %s153, 1
        %s343 = smul.addr %s342, 288
        %s344 = scalar_lea.vmem [#allocation11], %s343
        %s345 = smul.u32 4, %s31
        %s346 = smul.u32 4, %s31
        %s347 = smul.u32 16, %s32
        %s348 = smul.u32 4, %s31
        %p349 = scmp.eq.s32.totalorder %s32, 0
        // Predicated region
        $region53: #{tpu_custom_call.1} parent=35 // pred_check
          %p350 = pneg %p349
        $region54: #{tpu_custom_call.1} parent=35 // pred_check_branch
          %352 = sbr.rel (%p350) target = $region56
        $region55: #{tpu_custom_call.1} parent=35 // pred_region
          %v353 = vld [vmem:[%s280] sm:$0xff]
          %v354 = vld [vmem:[%s280 + $0x8] sm:$0xff]
          %v355 = vld [vmem:[%s280 + $0x10] sm:$0xff]
          %v356 = vld [vmem:[%s280 + $0x18] sm:$0xff]
          %v357 = vld [vmem:[%s280 + $0x20] sm:$0xff]
          %v358 = vld [vmem:[%s280 + $0x28] sm:$0xff]
          %v359 = vld [vmem:[%s280 + $0x30] sm:$0xff]
          %v360 = vld [vmem:[%s280 + $0x38] sm:$0xff]
          %v361 = vmul.f32 %v353, %v353
          %v362 = vmul.f32 %v354, %v354
          %v363 = vmul.f32 %v355, %v355
          %v364 = vmul.f32 %v356, %v356
          %v365 = vmul.f32 %v357, %v357
          %v366 = vmul.f32 %v358, %v358
          %v367 = vmul.f32 %v359, %v359
          %v368 = vmul.f32 %v360, %v360
          %v369 = vadd.f32 %v361, %v362
          %370 = vadd.xlane.f32.xlu0 %v369
          %v371 = vpop.xlane.xlu0 %370
          %v372 = vadd.f32 %v363, %v364
          %373 = vadd.xlane.f32.xlu0 %v372
          %v374 = vpop.xlane.xlu0 %373
          %v375 = vadd.f32 %v365, %v366
          %376 = vadd.xlane.f32.xlu0 %v375
          %v377 = vpop.xlane.xlu0 %376
          %v378 = vadd.f32 %v367, %v368
          %379 = vadd.xlane.f32.xlu0 %v378
          %v380 = vpop.xlane.xlu0 %379
          %v381 = vrcp.pop 256.0
          %v382 = vmul.f32 %v371, %v381
          %v383 = vmul.f32 %v374, %v381
          %v384 = vmul.f32 %v377, %v381
          %v385 = vmul.f32 %v380, %v381
          %v386 = vadd.f32 %v382, 1e-05
          %v387 = vadd.f32 %v383, 1e-05
          %v388 = vadd.f32 %v384, 1e-05
          %v389 = vadd.f32 %v385, 1e-05
          %v390 = vrsqrt.pop %v386
          %v391 = vrsqrt.pop %v387
          %v392 = vrsqrt.pop %v388
          %v393 = vrsqrt.pop %v389
          %vm394 = vcmask 7168
          %395 = vst.msk [vmem:[#allocation2] sm:$0xff] %vm394, %v390
          %396 = vst.msk [vmem:[#allocation2 + $0x8] sm:$0xff] %vm394, %v391
          %397 = vst.msk [vmem:[#allocation2 + $0x10] sm:$0xff] %vm394, %v392
          %398 = vst.msk [vmem:[#allocation2 + $0x18] sm:$0xff] %vm394, %v393
          %399 = vst [vmem:[%s344] sm:$0xff] 0.0
          %400 = vst [vmem:[%s344 + $0x8] sm:$0xff] 0.0
          %401 = vst [vmem:[%s344 + $0x10] sm:$0xff] 0.0
          %402 = vst [vmem:[%s344 + $0x18] sm:$0xff] 0.0
          %403 = vst [vmem:[%s344 + $0x20] sm:$0xff] 0.0
          %404 = vst [vmem:[%s344 + $0x28] sm:$0xff] 0.0
          %405 = vst [vmem:[%s344 + $0x30] sm:$0xff] 0.0
          %406 = vst [vmem:[%s344 + $0x38] sm:$0xff] 0.0
          %vm407 = vcmask 64512
          %408 = vst.msk [vmem:[%s344 + $0x40] sm:$0xff] %vm407, 0.0
          %409 = vst [vmem:[%s344 + $0x48] sm:$0xff] 0.0
          %410 = vst [vmem:[%s344 + $0x50] sm:$0xff] 0.0
          %411 = vst [vmem:[%s344 + $0x58] sm:$0xff] 0.0
          %412 = vst [vmem:[%s344 + $0x60] sm:$0xff] 0.0
          %413 = vst [vmem:[%s344 + $0x68] sm:$0xff] 0.0
          %414 = vst [vmem:[%s344 + $0x70] sm:$0xff] 0.0
          %415 = vst [vmem:[%s344 + $0x78] sm:$0xff] 0.0
          %416 = vst [vmem:[%s344 + $0x80] sm:$0xff] 0.0
          %417 = vst.msk [vmem:[%s344 + $0x88] sm:$0xff] %vm407, 0.0
          %418 = vst [vmem:[%s344 + $0x90] sm:$0xff] 0.0
          %419 = vst [vmem:[%s344 + $0x98] sm:$0xff] 0.0
          %420 = vst [vmem:[%s344 + $0xa0] sm:$0xff] 0.0
          %421 = vst [vmem:[%s344 + $0xa8] sm:$0xff] 0.0
          %422 = vst [vmem:[%s344 + $0xb0] sm:$0xff] 0.0
          %423 = vst [vmem:[%s344 + $0xb8] sm:$0xff] 0.0
          %424 = vst [vmem:[%s344 + $0xc0] sm:$0xff] 0.0
          %425 = vst [vmem:[%s344 + $0xc8] sm:$0xff] 0.0
          %426 = vst.msk [vmem:[%s344 + $0xd0] sm:$0xff] %vm407, 0.0
          %427 = vst [vmem:[%s344 + $0xd8] sm:$0xff] 0.0
          %428 = vst [vmem:[%s344 + $0xe0] sm:$0xff] 0.0
          %429 = vst [vmem:[%s344 + $0xe8] sm:$0xff] 0.0
          %430 = vst [vmem:[%s344 + $0xf0] sm:$0xff] 0.0
          %431 = vst [vmem:[%s344 + $0xf8] sm:$0xff] 0.0
          %432 = vst [vmem:[%s344 + $0x100] sm:$0xff] 0.0
          %433 = vst [vmem:[%s344 + $0x108] sm:$0xff] 0.0
          %434 = vst [vmem:[%s344 + $0x110] sm:$0xff] 0.0
          %435 = vst.msk [vmem:[%s344 + $0x118] sm:$0xff] %vm407, 0.0
        $region56: #{tpu_custom_call.1} parent=35 // pred_fallthru
          _
        %v436 = vld [vmem:[%s289] sm:$0xff]
        %v437 = vld [vmem:[%s289 + $0x8] sm:$0xff]
        %v438 = vld [vmem:[%s289 + $0x10] sm:$0xff]
        %v439 = vld [vmem:[%s289 + $0x18] sm:$0xff]
        %v440 = vld [vmem:[#allocation2] sm:$0xff]
        %v441 = vld [vmem:[#allocation2 + $0x8] sm:$0xff]
        %v442 = vld [vmem:[#allocation2 + $0x10] sm:$0xff]
        %v443 = vld [vmem:[#allocation2 + $0x18] sm:$0xff]
        %445 = vset.pattern.permute.xlu0 0
        %446 = vperm.xlu0 %445, %v440
        %v447 = vpop.permute.xlu0 %446
        %450 = vset.pattern.permute.xlu0 0
        %451 = vperm.xlu0 %450, %v441
        %v452 = vpop.permute.xlu0 %451
        %455 = vset.pattern.permute.xlu0 0
        %456 = vperm.xlu0 %455, %v442
        %v457 = vpop.permute.xlu0 %456
        %460 = vset.pattern.permute.xlu0 0
        %461 = vperm.xlu0 %460, %v443
        %v462 = vpop.permute.xlu0 %461
        %v464 = vmul.f32 %v436, %v447
        %v465 = vmul.f32 %v437, %v452
        %v466 = vmul.f32 %v438, %v457
        %v467 = vmul.f32 %v439, %v462
        %v468 = vld [vmem:[%s297] sm:$0x1]
        %v470 = vlaneseq
        %v471 = vshrl.u32 %v470, 7
        %v472 = vsub.s32 0, %v471
        %v473 = vrot.slane %v468, %v472
        %v475 = vmul.f32 %v464, %v473
        %v476 = vmul.f32 %v465, %v473
        %v477 = vmul.f32 %v466, %v473
        %v478 = vmul.f32 %v467, %v473
        %v479 = vld [vmem:[%s344] sm:$0xff]
        %v480 = vld [vmem:[%s344 + $0x8] sm:$0xff]
        %v481 = vld [vmem:[%s344 + $0x10] sm:$0xff]
        %v482 = vld [vmem:[%s344 + $0x18] sm:$0xff]
        %v483 = vld [vmem:[%s344 + $0x20] sm:$0xff]
        %v484 = vld [vmem:[%s344 + $0x28] sm:$0xff]
        %v485 = vld [vmem:[%s344 + $0x30] sm:$0xff]
        %v486 = vld [vmem:[%s344 + $0x38] sm:$0xff]
        %v487 = vld [vmem:[%s344 + $0x40] sm:$0xff]
        %v488 = vld [vmem:[%s344 + $0x48] sm:$0xff]
        %v489 = vld [vmem:[%s344 + $0x50] sm:$0xff]
        %v490 = vld [vmem:[%s344 + $0x58] sm:$0xff]
        %v491 = vld [vmem:[%s344 + $0x60] sm:$0xff]
        %v492 = vld [vmem:[%s344 + $0x68] sm:$0xff]
        %v493 = vld [vmem:[%s344 + $0x70] sm:$0xff]
        %v494 = vld [vmem:[%s344 + $0x78] sm:$0xff]
        %v495 = vld [vmem:[%s344 + $0x80] sm:$0xff]
        %v496 = vld [vmem:[%s344 + $0x88] sm:$0xff]
        %v497 = vld [vmem:[%s344 + $0x90] sm:$0xff]
        %v498 = vld [vmem:[%s344 + $0x98] sm:$0xff]
        %v499 = vld [vmem:[%s344 + $0xa0] sm:$0xff]
        %v500 = vld [vmem:[%s344 + $0xa8] sm:$0xff]
        %v501 = vld [vmem:[%s344 + $0xb0] sm:$0xff]
        %v502 = vld [vmem:[%s344 + $0xb8] sm:$0xff]
        %v503 = vld [vmem:[%s344 + $0xc0] sm:$0xff]
        %v504 = vld [vmem:[%s344 + $0xc8] sm:$0xff]
        %v505 = vld [vmem:[%s344 + $0xd0] sm:$0xff]
        %v506 = vld [vmem:[%s344 + $0xd8] sm:$0xff]
        %v507 = vld [vmem:[%s344 + $0xe0] sm:$0xff]
        %v508 = vld [vmem:[%s344 + $0xe8] sm:$0xff]
        %v509 = vld [vmem:[%s344 + $0xf0] sm:$0xff]
        %v510 = vld [vmem:[%s344 + $0xf8] sm:$0xff]
        %v511 = vld [vmem:[%s344 + $0x100] sm:$0xff]
        %v512 = vld [vmem:[%s344 + $0x108] sm:$0xff]
        %v513 = vld [vmem:[%s344 + $0x110] sm:$0xff]
        %v514 = vld [vmem:[%s344 + $0x118] sm:$0xff]
        %v515 = vld [vmem:[%s306] sm:$0xff]
        %v516 = vld [vmem:[%s306 + $0x8] sm:$0xff]
        %v517 = vld [vmem:[%s306 + $0x10] sm:$0xff]
        %v518 = vld [vmem:[%s306 + $0x18] sm:$0xff]
        %v519 = vld [vmem:[%s306 + $0x20] sm:$0xff]
        %v520 = vld [vmem:[%s306 + $0x28] sm:$0xff]
        %v521 = vld [vmem:[%s306 + $0x30] sm:$0xff]
        %v522 = vld [vmem:[%s306 + $0x38] sm:$0xff]
        %v523 = vld [vmem:[%s306 + $0x40] sm:$0xff]
        %v524 = vld [vmem:[%s306 + $0x48] sm:$0xff]
        %v525 = vld [vmem:[%s306 + $0x50] sm:$0xff]
        %v526 = vld [vmem:[%s306 + $0x58] sm:$0xff]
        %v527 = vld [vmem:[%s306 + $0x60] sm:$0xff]
        %v528 = vld [vmem:[%s306 + $0x68] sm:$0xff]
        %v529 = vld [vmem:[%s306 + $0x70] sm:$0xff]
        %v530 = vld [vmem:[%s306 + $0x78] sm:$0xff]
        %v531 = vld [vmem:[%s306 + $0x80] sm:$0xff]
        %v532 = vld [vmem:[%s306 + $0x88] sm:$0xff]
        %v533 = vld [vmem:[%s306 + $0x90] sm:$0xff]
        %v534 = vld [vmem:[%s306 + $0x98] sm:$0xff]
        %v535 = vld [vmem:[%s306 + $0xa0] sm:$0xff]
        %v536 = vld [vmem:[%s306 + $0xa8] sm:$0xff]
        %v537 = vld [vmem:[%s306 + $0xb0] sm:$0xff]
        %v538 = vld [vmem:[%s306 + $0xb8] sm:$0xff]
        %v539 = vld [vmem:[%s306 + $0xc0] sm:$0xff]
        %v540 = vld [vmem:[%s306 + $0xc8] sm:$0xff]
        %v541 = vld [vmem:[%s306 + $0xd0] sm:$0xff]
        %v542 = vld [vmem:[%s306 + $0xd8] sm:$0xff]
        %v543 = vld [vmem:[%s306 + $0xe0] sm:$0xff]
        %v544 = vld [vmem:[%s306 + $0xe8] sm:$0xff]
        %v545 = vld [vmem:[%s306 + $0xf0] sm:$0xff]
        %v546 = vld [vmem:[%s306 + $0xf8] sm:$0xff]
        %v547 = vld [vmem:[%s306 + $0x100] sm:$0xff]
        %v548 = vld [vmem:[%s306 + $0x108] sm:$0xff]
        %v549 = vld [vmem:[%s306 + $0x110] sm:$0xff]
        %v550 = vld [vmem:[%s306 + $0x118] sm:$0xff]
        %v551 = vld [vmem:[%s306 + $0x120] sm:$0xff]
        %v552 = vld [vmem:[%s306 + $0x128] sm:$0xff]
        %v553 = vld [vmem:[%s306 + $0x130] sm:$0xff]
        %v554 = vld [vmem:[%s306 + $0x138] sm:$0xff]
        %v555 = vld [vmem:[%s306 + $0x140] sm:$0xff]
        %v556 = vld [vmem:[%s306 + $0x148] sm:$0xff]
        %v557 = vld [vmem:[%s306 + $0x150] sm:$0xff]
        %v558 = vld [vmem:[%s306 + $0x158] sm:$0xff]
        %v559 = vld [vmem:[%s306 + $0x160] sm:$0xff]
        %v560 = vld [vmem:[%s306 + $0x168] sm:$0xff]
        %v561 = vld [vmem:[%s306 + $0x170] sm:$0xff]
        %v562 = vld [vmem:[%s306 + $0x178] sm:$0xff]
        %v563 = vld [vmem:[%s306 + $0x180] sm:$0xff]
        %v564 = vld [vmem:[%s306 + $0x188] sm:$0xff]
        %v565 = vld [vmem:[%s306 + $0x190] sm:$0xff]
        %v566 = vld [vmem:[%s306 + $0x198] sm:$0xff]
        %v567 = vld [vmem:[%s306 + $0x1a0] sm:$0xff]
        %v568 = vld [vmem:[%s306 + $0x1a8] sm:$0xff]
        %v569 = vld [vmem:[%s306 + $0x1b0] sm:$0xff]
        %v570 = vld [vmem:[%s306 + $0x1b8] sm:$0xff]
        %v571 = vld [vmem:[%s306 + $0x1c0] sm:$0xff]
        %v572 = vld [vmem:[%s306 + $0x1c8] sm:$0xff]
        %v573 = vld [vmem:[%s306 + $0x1d0] sm:$0xff]
        %v574 = vld [vmem:[%s306 + $0x1d8] sm:$0xff]
        %v575 = vld [vmem:[%s306 + $0x1e0] sm:$0xff]
        %v576 = vld [vmem:[%s306 + $0x1e8] sm:$0xff]
        %v577 = vld [vmem:[%s306 + $0x1f0] sm:$0xff]
        %v578 = vld [vmem:[%s306 + $0x1f8] sm:$0xff]
        %v579 = vld [vmem:[%s306 + $0x200] sm:$0xff]
        %v580 = vld [vmem:[%s306 + $0x208] sm:$0xff]
        %v581 = vld [vmem:[%s306 + $0x210] sm:$0xff]
        %v582 = vld [vmem:[%s306 + $0x218] sm:$0xff]
        %v583 = vld [vmem:[%s306 + $0x220] sm:$0xff]
        %v584 = vld [vmem:[%s306 + $0x228] sm:$0xff]
        %v585 = vld [vmem:[%s306 + $0x230] sm:$0xff]
        %v586 = vld [vmem:[%s306 + $0x238] sm:$0xff]
        %v587 = vld [vmem:[%s306 + $0x240] sm:$0xff]
        %v588 = vld [vmem:[%s306 + $0x248] sm:$0xff]
        %v589 = vld [vmem:[%s306 + $0x250] sm:$0xff]
        %v590 = vld [vmem:[%s306 + $0x258] sm:$0xff]
        %v591 = vld [vmem:[%s306 + $0x260] sm:$0xff]
        %v592 = vld [vmem:[%s306 + $0x268] sm:$0xff]
        %v593 = vld [vmem:[%s306 + $0x270] sm:$0xff]
        %v594 = vld [vmem:[%s306 + $0x278] sm:$0xff]
        %v595 = vld [vmem:[%s306 + $0x280] sm:$0xff]
        %v596 = vld [vmem:[%s306 + $0x288] sm:$0xff]
        %v597 = vld [vmem:[%s306 + $0x290] sm:$0xff]
        %v598 = vld [vmem:[%s306 + $0x298] sm:$0xff]
        %v599 = vld [vmem:[%s306 + $0x2a0] sm:$0xff]
        %v600 = vld [vmem:[%s306 + $0x2a8] sm:$0xff]
        %v601 = vld [vmem:[%s306 + $0x2b0] sm:$0xff]
        %v602 = vld [vmem:[%s306 + $0x2b8] sm:$0xff]
        %v603 = vld [vmem:[%s306 + $0x2c0] sm:$0xff]
        %v604 = vld [vmem:[%s306 + $0x2c8] sm:$0xff]
        %v605 = vld [vmem:[%s306 + $0x2d0] sm:$0xff]
        %v606 = vld [vmem:[%s306 + $0x2d8] sm:$0xff]
        %v607 = vld [vmem:[%s306 + $0x2e0] sm:$0xff]
        %v608 = vld [vmem:[%s306 + $0x2e8] sm:$0xff]
        %v609 = vld [vmem:[%s306 + $0x2f0] sm:$0xff]
        %v610 = vld [vmem:[%s306 + $0x2f8] sm:$0xff]
        %v611 = vld [vmem:[%s306 + $0x300] sm:$0xff]
        %v612 = vld [vmem:[%s306 + $0x308] sm:$0xff]
        %v613 = vld [vmem:[%s306 + $0x310] sm:$0xff]
        %v614 = vld [vmem:[%s306 + $0x318] sm:$0xff]
        %v615 = vld [vmem:[%s306 + $0x320] sm:$0xff]
        %v616 = vld [vmem:[%s306 + $0x328] sm:$0xff]
        %v617 = vld [vmem:[%s306 + $0x330] sm:$0xff]
        %v618 = vld [vmem:[%s306 + $0x338] sm:$0xff]
        %v619 = vld [vmem:[%s306 + $0x340] sm:$0xff]
        %v620 = vld [vmem:[%s306 + $0x348] sm:$0xff]
        %v621 = vld [vmem:[%s306 + $0x350] sm:$0xff]
        %v622 = vld [vmem:[%s306 + $0x358] sm:$0xff]
        %v623 = vld [vmem:[%s306 + $0x360] sm:$0xff]
        %v624 = vld [vmem:[%s306 + $0x368] sm:$0xff]
        %v625 = vld [vmem:[%s306 + $0x370] sm:$0xff]
        %v626 = vld [vmem:[%s306 + $0x378] sm:$0xff]
        %v627 = vld [vmem:[%s306 + $0x380] sm:$0xff]
        %v628 = vld [vmem:[%s306 + $0x388] sm:$0xff]
        %v629 = vld [vmem:[%s306 + $0x390] sm:$0xff]
        %v630 = vld [vmem:[%s306 + $0x398] sm:$0xff]
        %v631 = vld [vmem:[%s306 + $0x3a0] sm:$0xff]
        %v632 = vld [vmem:[%s306 + $0x3a8] sm:$0xff]
        %v633 = vld [vmem:[%s306 + $0x3b0] sm:$0xff]
        %v634 = vld [vmem:[%s306 + $0x3b8] sm:$0xff]
        %v635 = vld [vmem:[%s306 + $0x3c0] sm:$0xff]
        %v636 = vld [vmem:[%s306 + $0x3c8] sm:$0xff]
        %v637 = vld [vmem:[%s306 + $0x3d0] sm:$0xff]
        %v638 = vld [vmem:[%s306 + $0x3d8] sm:$0xff]
        %v639 = vld [vmem:[%s306 + $0x3e0] sm:$0xff]
        %v640 = vld [vmem:[%s306 + $0x3e8] sm:$0xff]
        %v641 = vld [vmem:[%s306 + $0x3f0] sm:$0xff]
        %v642 = vld [vmem:[%s306 + $0x3f8] sm:$0xff]
        %v643 = vld [vmem:[%s306 + $0x400] sm:$0xff]
        %v644 = vld [vmem:[%s306 + $0x408] sm:$0xff]
        %v645 = vld [vmem:[%s306 + $0x410] sm:$0xff]
        %v646 = vld [vmem:[%s306 + $0x418] sm:$0xff]
        %v647 = vld [vmem:[%s306 + $0x420] sm:$0xff]
        %v648 = vld [vmem:[%s306 + $0x428] sm:$0xff]
        %v649 = vld [vmem:[%s306 + $0x430] sm:$0xff]
        %v650 = vld [vmem:[%s306 + $0x438] sm:$0xff]
        %v651 = vld [vmem:[%s306 + $0x440] sm:$0xff]
        %v652 = vld [vmem:[%s306 + $0x448] sm:$0xff]
        %v653 = vld [vmem:[%s306 + $0x450] sm:$0xff]
        %v654 = vld [vmem:[%s306 + $0x458] sm:$0xff]
        %v655 = vld [vmem:[%s306 + $0x460] sm:$0xff]
        %v656 = vld [vmem:[%s306 + $0x468] sm:$0xff]
        %v657 = vld [vmem:[%s306 + $0x470] sm:$0xff]
        %v658 = vld [vmem:[%s306 + $0x478] sm:$0xff]
        %659 = vmatprep.subr.mxu0 %v516
        %660 = vmatpush1.msra.mxu0 %v515
        %661 = vmatprep.subr.mxu0 %v525
        %662 = vmatpush1.msra.mxu0 %v524
        %663 = vmatprep.subr.mxu0 %v534
        %664 = vmatpush1.msra.mxu0 %v533
        %665 = vmatprep.subr.mxu0 %v543
        %666 = vmatpush1.msra.mxu0 %v542
        %667 = vmatprep.subr.mxu0 %v552
        %668 = vmatpush1.msra.mxu0 %v551
        %669 = vmatprep.subr.mxu0 %v561
        %670 = vmatpush1.msra.mxu0 %v560
        %671 = vmatprep.subr.mxu0 %v570
        %672 = vmatpush1.msra.mxu0 %v569
        %673 = vmatprep.subr.mxu0 %v579
        %674 = vmatpush1.msra.mxu0 %v578
        %675 = vmatprep.subr.mxu0 %v588
        %676 = vmatpush1.msra.mxu0 %v587
        %677 = vmatprep.subr.mxu0 %v597
        %678 = vmatpush1.msra.mxu0 %v596
        %679 = vmatprep.subr.mxu0 %v606
        %680 = vmatpush1.msra.mxu0 %v605
        %681 = vmatprep.subr.mxu0 %v615
        %682 = vmatpush1.msra.mxu0 %v614
        %683 = vmatprep.subr.mxu0 %v624
        %684 = vmatpush1.msra.mxu0 %v623
        %685 = vmatprep.subr.mxu0 %v633
        %686 = vmatpush1.msra.mxu0 %v632
        %687 = vmatprep.subr.mxu0 %v642
        %688 = vmatpush1.msra.mxu0 %v641
        %689 = vmatprep.subr.mxu0 %v651
        %690 = vmatpush1.msra.mxu0 %v650
        %691 = vmatprep.subr.mxu0 0.0
        %692 = vmatpush1.msra.mxu0 0.0
        %693 = vmatprep.subr.mxu0 0.0
        %694 = vmatpush1.msra.mxu0 0.0
        %695 = vmatprep.subr.mxu0 0.0
        %696 = vmatpush1.msra.mxu0 0.0
        %697 = vmatprep.subr.mxu0 0.0
        %698 = vmatpush1.msra.mxu0 0.0
        %699 = vmatprep.subr.mxu0 0.0
        %700 = vmatpush1.msra.mxu0 0.0
        %701 = vmatprep.subr.mxu0 0.0
        %702 = vmatpush1.msra.mxu0 0.0
        %703 = vmatprep.subr.mxu0 0.0
        %704 = vmatpush1.msra.mxu0 0.0
        %705 = vmatprep.subr.mxu0 0.0
        %706 = vmatpush1.msra.mxu0 0.0
        %707 = vmatprep.subr.mxu0 0.0
        %708 = vmatpush1.msra.mxu0 0.0
        %709 = vmatprep.subr.mxu0 0.0
        %710 = vmatpush1.msra.mxu0 0.0
        %711 = vmatprep.subr.mxu0 0.0
        %712 = vmatpush1.msra.mxu0 0.0
        %713 = vmatprep.subr.mxu0 0.0
        %714 = vmatpush1.msra.mxu0 0.0
        %715 = vmatprep.subr.mxu0 0.0
        %716 = vmatpush1.msra.mxu0 0.0
        %717 = vmatprep.subr.mxu0 0.0
        %718 = vmatpush1.msra.mxu0 0.0
        %719 = vmatprep.subr.mxu0 0.0
        %720 = vmatpush1.msra.mxu0 0.0
        %721 = vmatprep.subr.mxu0 0.0
        %722 = vmatpush1.msra.mxu0 0.0
        %723 = vmatprep.mubr.f32.mxu0 0.0
        %724 = vmatmul.mubr.f32.gmra.mrb[0].mxu0 %v475
        %v725 = vpop.f32.mrb[0].mxu0
        %v726 = vadd.f32 0.0, %v725
        %v727 = vpop.f32.mrb[0].mxu0
        %v728 = vadd.f32 0.0, %v727
        %729 = vmatprep.mubr.f32.mxu0 0.0
        %730 = vmatmul.mubr.f32.gmra.mrb[0].mxu0 %v476
        %v731 = vpop.f32.mrb[0].mxu0
        %v732 = vadd.f32 0.0, %v731
        %v733 = vpop.f32.mrb[0].mxu0
        %v734 = vadd.f32 0.0, %v733
        %735 = vmatprep.mubr.f32.mxu0 0.0
        %736 = vmatmul.mubr.f32.gmra.mrb[0].mxu0 %v477
        %v737 = vpop.f32.mrb[0].mxu0
        %v738 = vadd.f32 0.0, %v737
        %v739 = vpop.f32.mrb[0].mxu0
        %v740 = vadd.f32 0.0, %v739
        %741 = vmatprep.mubr.f32.mxu0 0.0
        %742 = vmatmul.mubr.f32.gmra.mrb[0].mxu0 %v478
        %v743 = vpop.f32.mrb[0].mxu0
        %v744 = vadd.f32 0.0, %v743
        %v745 = vpop.f32.mrb[0].mxu0
        %v746 = vadd.f32 0.0, %v745
        %747 = vdwg.mxu0
        %748 = vmatprep.subr.mxu0 %v518
        %749 = vmatpush1.msra.mxu0 %v517
        %750 = vmatprep.subr.mxu0 %v527
        %751 = vmatpush1.msra.mxu0 %v526
        %752 = vmatprep.subr.mxu0 %v536
        %753 = vmatpush1.msra.mxu0 %v535
        %754 = vmatprep.subr.mxu0 %v545
        %755 = vmatpush1.msra.mxu0 %v544
        %756 = vmatprep.subr.mxu0 %v554
        %757 = vmatpush1.msra.mxu0 %v553
        %758 = vmatprep.subr.mxu0 %v563
        %759 = vmatpush1.msra.mxu0 %v562
        %760 = vmatprep.subr.mxu0 %v572
        %761 = vmatpush1.msra.mxu0 %v571
        %762 = vmatprep.subr.mxu0 %v581
        %763 = vmatpush1.msra.mxu0 %v580
        %764 = vmatprep.subr.mxu0 %v590
        %765 = vmatpush1.msra.mxu0 %v589
        %766 = vmatprep.subr.mxu0 %v599
        %767 = vmatpush1.msra.mxu0 %v598
        %768 = vmatprep.subr.mxu0 %v608
        %769 = vmatpush1.msra.mxu0 %v607
        %770 = vmatprep.subr.mxu0 %v617
        %771 = vmatpush1.msra.mxu0 %v616
        %772 = vmatprep.subr.mxu0 %v626
        %773 = vmatpush1.msra.mxu0 %v625
        %774 = vmatprep.subr.mxu0 %v635
        %775 = vmatpush1.msra.mxu0 %v634
        %776 = vmatprep.subr.mxu0 %v644
        %777 = vmatpush1.msra.mxu0 %v643
        %778 = vmatprep.subr.mxu0 %v653
        %779 = vmatpush1.msra.mxu0 %v652
        %780 = vmatprep.subr.mxu0 0.0
        %781 = vmatpush1.msra.mxu0 0.0
        %782 = vmatprep.subr.mxu0 0.0
        %783 = vmatpush1.msra.mxu0 0.0
        %784 = vmatprep.subr.mxu0 0.0
        %785 = vmatpush1.msra.mxu0 0.0
        %786 = vmatprep.subr.mxu0 0.0
        %787 = vmatpush1.msra.mxu0 0.0
        %788 = vmatprep.subr.mxu0 0.0
        %789 = vmatpush1.msra.mxu0 0.0
        %790 = vmatprep.subr.mxu0 0.0
        %791 = vmatpush1.msra.mxu0 0.0
        %792 = vmatprep.subr.mxu0 0.0
        %793 = vmatpush1.msra.mxu0 0.0
        %794 = vmatprep.subr.mxu0 0.0
        %795 = vmatpush1.msra.mxu0 0.0
        %796 = vmatprep.subr.mxu0 0.0
        %797 = vmatpush1.msra.mxu0 0.0
        %798 = vmatprep.subr.mxu0 0.0
        %799 = vmatpush1.msra.mxu0 0.0
        %800 = vmatprep.subr.mxu0 0.0
        %801 = vmatpush1.msra.mxu0 0.0
        %802 = vmatprep.subr.mxu0 0.0
        %803 = vmatpush1.msra.mxu0 0.0
        %804 = vmatprep.subr.mxu0 0.0
        %805 = vmatpush1.msra.mxu0 0.0
        %806 = vmatprep.subr.mxu0 0.0
        %807 = vmatpush1.msra.mxu0 0.0
        %808 = vmatprep.subr.mxu0 0.0
        %809 = vmatpush1.msra.mxu0 0.0
        %810 = vmatprep.subr.mxu0 0.0
        %811 = vmatpush1.msra.mxu0 0.0
        %812 = vmatprep.mubr.f32.mxu0 0.0
        %813 = vmatmul.mubr.f32.gmra.mrb[0].mxu0 %v475
        %v814 = vpop.f32.mrb[0].mxu0
        %v815 = vadd.f32 0.0, %v814
        %v816 = vpop.f32.mrb[0].mxu0
        %v817 = vadd.f32 0.0, %v816
        %818 = vmatprep.mubr.f32.mxu0 0.0
        %819 = vmatmul.mubr.f32.gmra.mrb[0].mxu0 %v476
        %v820 = vpop.f32.mrb[0].mxu0
        %v821 = vadd.f32 0.0, %v820
        %v822 = vpop.f32.mrb[0].mxu0
        %v823 = vadd.f32 0.0, %v822
        %824 = vmatprep.mubr.f32.mxu0 0.0
        %825 = vmatmul.mubr.f32.gmra.mrb[0].mxu0 %v477
        %v826 = vpop.f32.mrb[0].mxu0
        %v827 = vadd.f32 0.0, %v826
        %v828 = vpop.f32.mrb[0].mxu0
        %v829 = vadd.f32 0.0, %v828
        %830 = vmatprep.mubr.f32.mxu0 0.0
        %831 = vmatmul.mubr.f32.gmra.mrb[0].mxu0 %v478
        %v832 = vpop.f32.mrb[0].mxu0
        %v833 = vadd.f32 0.0, %v832
        %v834 = vpop.f32.mrb[0].mxu0
        %v835 = vadd.f32 0.0, %v834
        %836 = vdwg.mxu0
        %837 = vmatprep.subr.mxu0 %v520
        %838 = vmatpush1.msra.mxu0 %v519
        %839 = vmatprep.subr.mxu0 %v529
        %840 = vmatpush1.msra.mxu0 %v528
        %841 = vmatprep.subr.mxu0 %v538
        %842 = vmatpush1.msra.mxu0 %v537
        %843 = vmatprep.subr.mxu0 %v547
        %844 = vmatpush1.msra.mxu0 %v546
        %845 = vmatprep.subr.mxu0 %v556
        %846 = vmatpush1.msra.mxu0 %v555
        %847 = vmatprep.subr.mxu0 %v565
        %848 = vmatpush1.msra.mxu0 %v564
        %849 = vmatprep.subr.mxu0 %v574
        %850 = vmatpush1.msra.mxu0 %v573
        %851 = vmatprep.subr.mxu0 %v583
        %852 = vmatpush1.msra.mxu0 %v582
        %853 = vmatprep.subr.mxu0 %v592
        %854 = vmatpush1.msra.mxu0 %v591
        %855 = vmatprep.subr.mxu0 %v601
        %856 = vmatpush1.msra.mxu0 %v600
        %857 = vmatprep.subr.mxu0 %v610
        %858 = vmatpush1.msra.mxu0 %v609
        %859 = vmatprep.subr.mxu0 %v619
        %860 = vmatpush1.msra.mxu0 %v618
        %861 = vmatprep.subr.mxu0 %v628
        %862 = vmatpush1.msra.mxu0 %v627
        %863 = vmatprep.subr.mxu0 %v637
        %864 = vmatpush1.msra.mxu0 %v636
        %865 = vmatprep.subr.mxu0 %v646
        %866 = vmatpush1.msra.mxu0 %v645
        %867 = vmatprep.subr.mxu0 %v655
        %868 = vmatpush1.msra.mxu0 %v654
        %869 = vmatprep.subr.mxu0 0.0
        %870 = vmatpush1.msra.mxu0 0.0
        %871 = vmatprep.subr.mxu0 0.0
        %872 = vmatpush1.msra.mxu0 0.0
        %873 = vmatprep.subr.mxu0 0.0
        %874 = vmatpush1.msra.mxu0 0.0
        %875 = vmatprep.subr.mxu0 0.0
        %876 = vmatpush1.msra.mxu0 0.0
        %877 = vmatprep.subr.mxu0 0.0
        %878 = vmatpush1.msra.mxu0 0.0
        %879 = vmatprep.subr.mxu0 0.0
        %880 = vmatpush1.msra.mxu0 0.0
        %881 = vmatprep.subr.mxu0 0.0
        %882 = vmatpush1.msra.mxu0 0.0
        %883 = vmatprep.subr.mxu0 0.0
        %884 = vmatpush1.msra.mxu0 0.0
        %885 = vmatprep.subr.mxu0 0.0
        %886 = vmatpush1.msra.mxu0 0.0
        %887 = vmatprep.subr.mxu0 0.0
        %888 = vmatpush1.msra.mxu0 0.0
        %889 = vmatprep.subr.mxu0 0.0
        %890 = vmatpush1.msra.mxu0 0.0
        %891 = vmatprep.subr.mxu0 0.0
        %892 = vmatpush1.msra.mxu0 0.0
        %893 = vmatprep.subr.mxu0 0.0
        %894 = vmatpush1.msra.mxu0 0.0
        %895 = vmatprep.subr.mxu0 0.0
        %896 = vmatpush1.msra.mxu0 0.0
        %897 = vmatprep.subr.mxu0 0.0
        %898 = vmatpush1.msra.mxu0 0.0
        %899 = vmatprep.subr.mxu0 0.0
        %900 = vmatpush1.msra.mxu0 0.0
        %901 = vmatprep.mubr.f32.mxu0 0.0
        %902 = vmatmul.mubr.f32.gmra.mrb[0].mxu0 %v475
        %v903 = vpop.f32.mrb[0].mxu0
        %v904 = vadd.f32 0.0, %v903
        %v905 = vpop.f32.mrb[0].mxu0
        %v906 = vadd.f32 0.0, %v905
        %907 = vmatprep.mubr.f32.mxu0 0.0
        %908 = vmatmul.mubr.f32.gmra.mrb[0].mxu0 %v476
        %v909 = vpop.f32.mrb[0].mxu0
        %v910 = vadd.f32 0.0, %v909
        %v911 = vpop.f32.mrb[0].mxu0
        %v912 = vadd.f32 0.0, %v911
        %913 = vmatprep.mubr.f32.mxu0 0.0
        %914 = vmatmul.mubr.f32.gmra.mrb[0].mxu0 %v477
        %v915 = vpop.f32.mrb[0].mxu0
        %v916 = vadd.f32 0.0, %v915
        %v917 = vpop.f32.mrb[0].mxu0
        %v918 = vadd.f32 0.0, %v917
        %919 = vmatprep.mubr.f32.mxu0 0.0
        %920 = vmatmul.mubr.f32.gmra.mrb[0].mxu0 %v478
        %v921 = vpop.f32.mrb[0].mxu0
        %v922 = vadd.f32 0.0, %v921
        %v923 = vpop.f32.mrb[0].mxu0
        %v924 = vadd.f32 0.0, %v923
        %925 = vdwg.mxu0
        %926 = vmatprep.subr.mxu0 %v522
        %927 = vmatpush1.msra.mxu0 %v521
        %928 = vmatprep.subr.mxu0 %v531
        %929 = vmatpush1.msra.mxu0 %v530
        %930 = vmatprep.subr.mxu0 %v540
        %931 = vmatpush1.msra.mxu0 %v539
        %932 = vmatprep.subr.mxu0 %v549
        %933 = vmatpush1.msra.mxu0 %v548
        %934 = vmatprep.subr.mxu0 %v558
        %935 = vmatpush1.msra.mxu0 %v557
        %936 = vmatprep.subr.mxu0 %v567
        %937 = vmatpush1.msra.mxu0 %v566
        %938 = vmatprep.subr.mxu0 %v576
        %939 = vmatpush1.msra.mxu0 %v575
        %940 = vmatprep.subr.mxu0 %v585
        %941 = vmatpush1.msra.mxu0 %v584
        %942 = vmatprep.subr.mxu0 %v594
        %943 = vmatpush1.msra.mxu0 %v593
        %944 = vmatprep.subr.mxu0 %v603
        %945 = vmatpush1.msra.mxu0 %v602
        %946 = vmatprep.subr.mxu0 %v612
        %947 = vmatpush1.msra.mxu0 %v611
        %948 = vmatprep.subr.mxu0 %v621
        %949 = vmatpush1.msra.mxu0 %v620
        %950 = vmatprep.subr.mxu0 %v630
        %951 = vmatpush1.msra.mxu0 %v629
        %952 = vmatprep.subr.mxu0 %v639
        %953 = vmatpush1.msra.mxu0 %v638
        %954 = vmatprep.subr.mxu0 %v648
        %955 = vmatpush1.msra.mxu0 %v647
        %956 = vmatprep.subr.mxu0 %v657
        %957 = vmatpush1.msra.mxu0 %v656
        %958 = vmatprep.subr.mxu0 0.0
        %959 = vmatpush1.msra.mxu0 0.0
        %960 = vmatprep.subr.mxu0 0.0
        %961 = vmatpush1.msra.mxu0 0.0
        %962 = vmatprep.subr.mxu0 0.0
        %963 = vmatpush1.msra.mxu0 0.0
        %964 = vmatprep.subr.mxu0 0.0
        %965 = vmatpush1.msra.mxu0 0.0
        %966 = vmatprep.subr.mxu0 0.0
        %967 = vmatpush1.msra.mxu0 0.0
        %968 = vmatprep.subr.mxu0 0.0
        %969 = vmatpush1.msra.mxu0 0.0
        %970 = vmatprep.subr.mxu0 0.0
        %971 = vmatpush1.msra.mxu0 0.0
        %972 = vmatprep.subr.mxu0 0.0
        %973 = vmatpush1.msra.mxu0 0.0
        %974 = vmatprep.subr.mxu0 0.0
        %975 = vmatpush1.msra.mxu0 0.0
        %976 = vmatprep.subr.mxu0 0.0
        %977 = vmatpush1.msra.mxu0 0.0
        %978 = vmatprep.subr.mxu0 0.0
        %979 = vmatpush1.msra.mxu0 0.0
        %980 = vmatprep.subr.mxu0 0.0
        %981 = vmatpush1.msra.mxu0 0.0
        %982 = vmatprep.subr.mxu0 0.0
        %983 = vmatpush1.msra.mxu0 0.0
        %984 = vmatprep.subr.mxu0 0.0
        %985 = vmatpush1.msra.mxu0 0.0
        %986 = vmatprep.subr.mxu0 0.0
        %987 = vmatpush1.msra.mxu0 0.0
        %988 = vmatprep.subr.mxu0 0.0
        %989 = vmatpush1.msra.mxu0 0.0
        %990 = vmatprep.mubr.f32.mxu0 0.0
        %991 = vmatmul.mubr.f32.gmra.mrb[0].mxu0 %v475
        %v992 = vpop.f32.mrb[0].mxu0
        %v993 = vadd.f32 0.0, %v992
        %v994 = vpop.f32.mrb[0].mxu0
        %v995 = vadd.f32 0.0, %v994
        %996 = vmatprep.mubr.f32.mxu0 0.0
        %997 = vmatmul.mubr.f32.gmra.mrb[0].mxu0 %v476
        %v998 = vpop.f32.mrb[0].mxu0
        %v999 = vadd.f32 0.0, %v998
        %v1000 = vpop.f32.mrb[0].mxu0
        %v1001 = vadd.f32 0.0, %v1000
        %1002 = vmatprep.mubr.f32.mxu0 0.0
        %1003 = vmatmul.mubr.f32.gmra.mrb[0].mxu0 %v477
        %v1004 = vpop.f32.mrb[0].mxu0
        %v1005 = vadd.f32 0.0, %v1004
        %v1006 = vpop.f32.mrb[0].mxu0
        %v1007 = vadd.f32 0.0, %v1006
        %1008 = vmatprep.mubr.f32.mxu0 0.0
        %1009 = vmatmul.mubr.f32.gmra.mrb[0].mxu0 %v478
        %v1010 = vpop.f32.mrb[0].mxu0
        %v1011 = vadd.f32 0.0, %v1010
        %v1012 = vpop.f32.mrb[0].mxu0
        %v1013 = vadd.f32 0.0, %v1012
        %1014 = vdwg.mxu0
        %1015 = vmatprep.subr.mxu0 0.0
        %1016 = vmatpush1.msra.mxu0 %v523
        %1017 = vmatprep.subr.mxu0 0.0
        %1018 = vmatpush1.msra.mxu0 %v532
        %1019 = vmatprep.subr.mxu0 0.0
        %1020 = vmatpush1.msra.mxu0 %v541
        %1021 = vmatprep.subr.mxu0 0.0
        %1022 = vmatpush1.msra.mxu0 %v550
        %1023 = vmatprep.subr.mxu0 0.0
        %1024 = vmatpush1.msra.mxu0 %v559
        %1025 = vmatprep.subr.mxu0 0.0
        %1026 = vmatpush1.msra.mxu0 %v568
        %1027 = vmatprep.subr.mxu0 0.0
        %1028 = vmatpush1.msra.mxu0 %v577
        %1029 = vmatprep.subr.mxu0 0.0
        %1030 = vmatpush1.msra.mxu0 %v586
        %1031 = vmatprep.subr.mxu0 0.0
        %1032 = vmatpush1.msra.mxu0 %v595
        %1033 = vmatprep.subr.mxu0 0.0
        %1034 = vmatpush1.msra.mxu0 %v604
        %1035 = vmatprep.subr.mxu0 0.0
        %1036 = vmatpush1.msra.mxu0 %v613
        %1037 = vmatprep.subr.mxu0 0.0
        %1038 = vmatpush1.msra.mxu0 %v622
        %1039 = vmatprep.subr.mxu0 0.0
        %1040 = vmatpush1.msra.mxu0 %v631
        %1041 = vmatprep.subr.mxu0 0.0
        %1042 = vmatpush1.msra.mxu0 %v640
        %1043 = vmatprep.subr.mxu0 0.0
        %1044 = vmatpush1.msra.mxu0 %v649
        %1045 = vmatprep.subr.mxu0 0.0
        %1046 = vmatpush1.msra.mxu0 %v658
        %1047 = vmatprep.subr.mxu0 0.0
        %1048 = vmatpush1.msra.mxu0 0.0
        %1049 = vmatprep.subr.mxu0 0.0
        %1050 = vmatpush1.msra.mxu0 0.0
        %1051 = vmatprep.subr.mxu0 0.0
        %1052 = vmatpush1.msra.mxu0 0.0
        %1053 = vmatprep.subr.mxu0 0.0
        %1054 = vmatpush1.msra.mxu0 0.0
        %1055 = vmatprep.subr.mxu0 0.0
        %1056 = vmatpush1.msra.mxu0 0.0
        %1057 = vmatprep.subr.mxu0 0.0
        %1058 = vmatpush1.msra.mxu0 0.0
        %1059 = vmatprep.subr.mxu0 0.0
        %1060 = vmatpush1.msra.mxu0 0.0
        %1061 = vmatprep.subr.mxu0 0.0
        %1062 = vmatpush1.msra.mxu0 0.0
        %1063 = vmatprep.subr.mxu0 0.0
        %1064 = vmatpush1.msra.mxu0 0.0
        %1065 = vmatprep.subr.mxu0 0.0
        %1066 = vmatpush1.msra.mxu0 0.0
        %1067 = vmatprep.subr.mxu0 0.0
        %1068 = vmatpush1.msra.mxu0 0.0
        %1069 = vmatprep.subr.mxu0 0.0
        %1070 = vmatpush1.msra.mxu0 0.0
        %1071 = vmatprep.subr.mxu0 0.0
        %1072 = vmatpush1.msra.mxu0 0.0
        %1073 = vmatprep.subr.mxu0 0.0
        %1074 = vmatpush1.msra.mxu0 0.0
        %1075 = vmatprep.subr.mxu0 0.0
        %1076 = vmatpush1.msra.mxu0 0.0
        %1077 = vmatprep.subr.mxu0 0.0
        %1078 = vmatpush1.msra.mxu0 0.0
        %1079 = vmatprep.mubr.f32.mxu0 0.0
        %1080 = vmatmul.mubr.f32.gmra.mrb[0].mxu0 %v475
        %v1081 = vpop.f32.mrb[0].mxu0
        %v1082 = vadd.f32 0.0, %v1081
        %v1083 = vpop.f32.mrb[0].mxu0
        %1084 = vmatprep.mubr.f32.mxu0 0.0
        %1085 = vmatmul.mubr.f32.gmra.mrb[0].mxu0 %v476
        %v1086 = vpop.f32.mrb[0].mxu0
        %v1087 = vadd.f32 0.0, %v1086
        %v1088 = vpop.f32.mrb[0].mxu0
        %1089 = vmatprep.mubr.f32.mxu0 0.0
        %1090 = vmatmul.mubr.f32.gmra.mrb[0].mxu0 %v477
        %v1091 = vpop.f32.mrb[0].mxu0
        %v1092 = vadd.f32 0.0, %v1091
        %v1093 = vpop.f32.mrb[0].mxu0
        %1094 = vmatprep.mubr.f32.mxu0 0.0
        %1095 = vmatmul.mubr.f32.gmra.mrb[0].mxu0 %v478
        %v1096 = vpop.f32.mrb[0].mxu0
        %v1097 = vadd.f32 0.0, %v1096
        %v1098 = vpop.f32.mrb[0].mxu0
        %1099 = vdwg.mxu0
        %v1100 = vadd.f32 %v479, %v726
        %v1101 = vadd.f32 %v480, %v728
        %v1102 = vadd.f32 %v481, %v815
        %v1103 = vadd.f32 %v482, %v817
        %v1104 = vadd.f32 %v483, %v904
        %v1105 = vadd.f32 %v484, %v906
        %v1106 = vadd.f32 %v485, %v993
        %v1107 = vadd.f32 %v486, %v995
        %v1108 = vadd.f32 %v487, %v1082
        %v1109 = vadd.f32 %v488, %v732
        %v1110 = vadd.f32 %v489, %v734
        %v1111 = vadd.f32 %v490, %v821
        %v1112 = vadd.f32 %v491, %v823
        %v1113 = vadd.f32 %v492, %v910
        %v1114 = vadd.f32 %v493, %v912
        %v1115 = vadd.f32 %v494, %v999
        %v1116 = vadd.f32 %v495, %v1001
        %v1117 = vadd.f32 %v496, %v1087
        %v1118 = vadd.f32 %v497, %v738
        %v1119 = vadd.f32 %v498, %v740
        %v1120 = vadd.f32 %v499, %v827
        %v1121 = vadd.f32 %v500, %v829
        %v1122 = vadd.f32 %v501, %v916
        %v1123 = vadd.f32 %v502, %v918
        %v1124 = vadd.f32 %v503, %v1005
        %v1125 = vadd.f32 %v504, %v1007
        %v1126 = vadd.f32 %v505, %v1092
        %v1127 = vadd.f32 %v506, %v744
        %v1128 = vadd.f32 %v507, %v746
        %v1129 = vadd.f32 %v508, %v833
        %v1130 = vadd.f32 %v509, %v835
        %v1131 = vadd.f32 %v510, %v922
        %v1132 = vadd.f32 %v511, %v924
        %v1133 = vadd.f32 %v512, %v1011
        %v1134 = vadd.f32 %v513, %v1013
        %v1135 = vadd.f32 %v514, %v1097
        %1136 = vst [vmem:[%s344] sm:$0xff] %v1100
        %1137 = vst [vmem:[%s344 + $0x8] sm:$0xff] %v1101
        %1138 = vst [vmem:[%s344 + $0x10] sm:$0xff] %v1102
        %1139 = vst [vmem:[%s344 + $0x18] sm:$0xff] %v1103
        %1140 = vst [vmem:[%s344 + $0x20] sm:$0xff] %v1104
        %1141 = vst [vmem:[%s344 + $0x28] sm:$0xff] %v1105
        %1142 = vst [vmem:[%s344 + $0x30] sm:$0xff] %v1106
        %1143 = vst [vmem:[%s344 + $0x38] sm:$0xff] %v1107
        %vm1144 = vcmask 64512
        %1145 = vst.msk [vmem:[%s344 + $0x40] sm:$0xff] %vm1144, %v1108
        %1146 = vst [vmem:[%s344 + $0x48] sm:$0xff] %v1109
        %1147 = vst [vmem:[%s344 + $0x50] sm:$0xff] %v1110
        %1148 = vst [vmem:[%s344 + $0x58] sm:$0xff] %v1111
        %1149 = vst [vmem:[%s344 + $0x60] sm:$0xff] %v1112
        %1150 = vst [vmem:[%s344 + $0x68] sm:$0xff] %v1113
        %1151 = vst [vmem:[%s344 + $0x70] sm:$0xff] %v1114
        %1152 = vst [vmem:[%s344 + $0x78] sm:$0xff] %v1115
        %1153 = vst [vmem:[%s344 + $0x80] sm:$0xff] %v1116
        %1154 = vst.msk [vmem:[%s344 + $0x88] sm:$0xff] %vm1144, %v1117
        %1155 = vst [vmem:[%s344 + $0x90] sm:$0xff] %v1118
        %1156 = vst [vmem:[%s344 + $0x98] sm:$0xff] %v1119
        %1157 = vst [vmem:[%s344 + $0xa0] sm:$0xff] %v1120
        %1158 = vst [vmem:[%s344 + $0xa8] sm:$0xff] %v1121
        %1159 = vst [vmem:[%s344 + $0xb0] sm:$0xff] %v1122
        %1160 = vst [vmem:[%s344 + $0xb8] sm:$0xff] %v1123
        %1161 = vst [vmem:[%s344 + $0xc0] sm:$0xff] %v1124
        %1162 = vst [vmem:[%s344 + $0xc8] sm:$0xff] %v1125
        %1163 = vst.msk [vmem:[%s344 + $0xd0] sm:$0xff] %vm1144, %v1126
        %1164 = vst [vmem:[%s344 + $0xd8] sm:$0xff] %v1127
        %1165 = vst [vmem:[%s344 + $0xe0] sm:$0xff] %v1128
        %1166 = vst [vmem:[%s344 + $0xe8] sm:$0xff] %v1129
        %1167 = vst [vmem:[%s344 + $0xf0] sm:$0xff] %v1130
        %1168 = vst [vmem:[%s344 + $0xf8] sm:$0xff] %v1131
        %1169 = vst [vmem:[%s344 + $0x100] sm:$0xff] %v1132
        %1170 = vst [vmem:[%s344 + $0x108] sm:$0xff] %v1133
        %1171 = vst [vmem:[%s344 + $0x110] sm:$0xff] %v1134
        %1172 = vst.msk [vmem:[%s344 + $0x118] sm:$0xff] %vm1144, %v1135
        %s1173 = sand.u32 %s153, 1
        %s1174 = scalar_lea.sflag [#allocation5], %s1173
        %s1175 = sand.u32 %s153, 1
        %s1176 = smul.addr %s1175, 288
        %s1177 = scalar_lea.vmem [#allocation11], %s1176
        // Predicated region
        $region57: #{tpu_custom_call.1} parent=35 // pred_check
          %p1178 = pneg %p163
        $region58: #{tpu_custom_call.1} parent=35 // pred_check_branch
          %1180 = sbr.rel (%p1178) target = $region60
        $region59: #{tpu_custom_call.1} parent=35 // pred_region
          %s1181 = smul.u32 4, %s31
          %s1183 = ssub.s32 4608, 4608
          %1184 = vsyncadd %s1174, %s1183
          %s1185 = smul.addr %s1181, 9
          %s1186 = smul.addr %s1185, 128
          %s1187 = scalar_lea.hbm %s4, %s1186
          %s1188 = sshll.u32 %s1177, 4
          %s1189 = int_to_ptr.vmem [resolvable:$true] %s1188
          %1194 = dma.vmem_to_hbm [thread:$0]  %s1189, 4608, %s1187, %s1174, 1152, 1152, 72
        $region60: #{tpu_custom_call.1} parent=35 // pred_fallthru
          _
      $region36: #{tpu_custom_call.1} parent=5 // pred_fallthru
        _
      %p1195 = scmp.le.s32.totalorder 2, %s22
      // Predicated region
      $region61: #{tpu_custom_call.1} parent=5 // pred_check
        %p1196 = pneg %p1195
      $region62: #{tpu_custom_call.1} parent=5 // pred_check_branch
        %1198 = sbr.rel (%p1196) target = $region64
      $region63: #{tpu_custom_call.1} parent=5 // pred_region
        %s1199 = ssub.s32 %s22, 2
        // Predicated region
        $region65: #{tpu_custom_call.1} parent=63 // pred_check
          %p1200 = pneg %p169
        $region66: #{tpu_custom_call.1} parent=63 // pred_check_branch
          %1202 = sbr.rel (%p1200) target = $region68
        $region67: #{tpu_custom_call.1} parent=63 // pred_region
          %s1203 = sand.u32 %s154, 1
          %s1204 = scalar_lea.sflag [#allocation5], %s1203
          %s1205 = sand.u32 %s154, 1
          %s1206 = smul.addr %s1205, 288
          %s1207 = scalar_lea.vmem [#allocation11], %s1206
          %1208 = dma.done %s1204, 4608
        $region68: #{tpu_custom_call.1} parent=63 // pred_fallthru
          _
      $region64: #{tpu_custom_call.1} parent=5 // pred_fallthru
        _
    $region6: #{tpu_custom_call.1} parent=1 // loop_footer
      %s26 = sadd.s32 1, %s22
    $region7: #{tpu_custom_call.1} parent=1 // loop_footer_branch
      %21 = sbr.rel target = $region3
    $region8: #{tpu_custom_call.1} parent=1 // loop_exit
      _
    %1209 = vsyncpa [#allocation4], 1
    %s1210 = scalar_lea.sflag [#allocation4], 1
    %1211 = vsyncpa %s1210, 1
    %1212 = vsyncpa [#allocation7], 1
    %s1213 = scalar_lea.sflag [#allocation7], 1
    %1214 = vsyncpa %s1213, 1
    %1215 = vsyncpa [#allocation10], 1
    %s1216 = scalar_lea.sflag [#allocation10], 1
    %1217 = vsyncpa %s1216, 1
    %1218 = vsyncpa [#allocation5], 1
    %s1219 = scalar_lea.sflag [#allocation5], 1
    %1220 = vsyncpa %s1219, 1

</llo_original>
